<compile_context>
chip_gen: v7x
topology: tpu7x:2x2x1
jax: 0.10.0
libtpu: 0.0.40
codegen_flags: <defaults>
</compile_context>

<pallas_src>
import jax
import jax.numpy as jnp
from jax import lax
from jax.experimental import pallas as pl
from jax.experimental.pallas import tpu as pltpu
from math import log


def efm_kernel(c_ref, a_ref, wka_ref, wkb_ref, bns_ref, bnb_ref, w1d_ref,
               o_ref, xl_ref, xc_ref, xr_ref, col_ref, wp_ref):
    _, H, W, C = c_ref.shape
    HW = H * W
    k = w1d_ref.shape[0]
    p = (k - 1) // 2

    # x = c*att + c  (f32 elementwise on the VPU).
    xf = (c_ref[...] * a_ref[...] + c_ref[...]).reshape(HW, C)        # (HW, C) f32

    # In-register W shifts (f32), masked at row boundaries so nothing leaks across rows.
    w_idx = lax.broadcasted_iota(jnp.int32, (HW, C), 0) % W
    zrow = jnp.zeros((1, C), jnp.float32)
    x_l = jnp.where(w_idx == 0, 0.0,
                    jnp.concatenate([zrow, xf[:HW - 1]], axis=0))     # x[h, w-1]
    x_r = jnp.where(w_idx == W - 1, 0.0,
                    jnp.concatenate([xf[1:], zrow], axis=0))          # x[h, w+1]

    # bf16 halo copies, padded in H only and kept flat as ((H+2)*W, C):
    # interior / halo stores and all later tap loads start at multiples of W rows,
    # so every access is sublane-aligned and unmasked.
    zpad = jnp.zeros((W, C), jnp.bfloat16)
    for ref, xv in ((xl_ref, x_l), (xc_ref, xf), (xr_ref, x_r)):
        ref[0:W, :] = zpad                                   # top halo row
        ref[(H + 1) * W:(H + 2) * W, :] = zpad               # bottom halo row
        ref[W:(H + 1) * W, :] = xv.astype(jnp.bfloat16)      # single cast, aligned store

    shifted = (xl_ref, xc_ref, xr_ref)                       # index = kx

    def tap(ky, kx):                                         # (HW, C) bf16, aligned slice
        return shifted[kx][ky * W:ky * W + HW, :]

    # im2col: taps 0..7 -> two 128-lane-aligned unmasked column stores; tap 8 is fed
    # directly to a second small matmul (no masked col store at all).
    col_ref[:, 0 * C:4 * C] = jnp.concatenate(
        [tap(0, 0), tap(0, 1), tap(0, 2), tap(1, 0)], axis=-1)
    col_ref[:, 4 * C:8 * C] = jnp.concatenate(
        [tap(1, 1), tap(1, 2), tap(2, 0), tap(2, 1)], axis=-1)

    # 3x3 conv = one K=8C matmul + one K=C matmul on the MXU, f32 accumulation.
    acc = jnp.dot(col_ref[...], wka_ref[...], preferred_element_type=jnp.float32)
    acc = acc + jnp.dot(tap(2, 2), wkb_ref[...], preferred_element_type=jnp.float32)

    # Folded BatchNorm (eval mode) + ReLU, f32.
    y = jnp.maximum(acc * bns_ref[...] + bnb_ref[...], 0.0)           # (HW, C)

    # Global average pool over the spatial axis -> (1, C).
    pooled = jnp.mean(y, axis=0, keepdims=True)

    # Conv1d(1, 1, k, padding=(k-1)//2, bias=False) over channels on the VPU:
    # zero-padded window + k shifted lane slices (no CxC band matmul).
    wp_ref[...] = jnp.zeros(wp_ref.shape, wp_ref.dtype)
    wp_ref[:, p:p + C] = pooled
    conv = w1d_ref[0] * wp_ref[:, 0:C]
    for j in range(1, k):
        conv = conv + w1d_ref[j] * wp_ref[:, j:j + C]
    wei = jax.nn.sigmoid(conv)                                        # (1, C)

    # out = y * wei  (y is the ConvBNR output; matches the PyTorch forward, which
    # rebinds x = self.conv2d(x) before the final multiply).
    # Output kept at C=32 lanes; lane-dense relayout intentionally skipped at this size.
    o_ref[...] = (y * wei).reshape(1, HW, C)


def efm_pallas(c_nhwc, att_nhwc, w_hwio, bn_scale, bn_bias, w1d):
    """c, att: (N,H,W,C) f32; w_hwio: (3,3,Cin,Cout); bn_*: (C,); w1d: (k,)."""
    N, H, W, C = c_nhwc.shape
    k = int(w1d.shape[0])
    p = (k - 1) // 2

    # Conv weight pre-reshaped for the im2col matmuls; row = (ky*3+kx)*C + cin.
    wk2d = w_hwio.reshape(9 * C, C).astype(jnp.bfloat16)
    wka = wk2d[:8 * C]                                   # taps 0..7
    wkb = wk2d[8 * C:]                                   # tap 8 (ky=2, kx=2)
    bns = bn_scale.reshape(1, C).astype(jnp.float32)
    bnb = bn_bias.reshape(1, C).astype(jnp.float32)

    grid_spec = pltpu.PrefetchScalarGridSpec(
        num_scalar_prefetch=0,
        grid=(N,),                                       # one batch element per step
        in_specs=[
            pl.BlockSpec((1, H, W, C), lambda n: (n, 0, 0, 0)),     # c
            pl.BlockSpec((1, H, W, C), lambda n: (n, 0, 0, 0)),     # att
            pl.BlockSpec((8 * C, C), lambda n: (0, 0)),             # conv weight, taps 0..7
            pl.BlockSpec((C, C), lambda n: (0, 0)),                 # conv weight, tap 8
            pl.BlockSpec((1, C), lambda n: (0, 0)),                 # BN scale (folded)
            pl.BlockSpec((1, C), lambda n: (0, 0)),                 # BN bias (folded)
            pl.BlockSpec(memory_space=pltpu.MemorySpace.SMEM),      # conv1d taps (k,)
        ],
        out_specs=pl.BlockSpec((1, H * W, C), lambda n: (n, 0, 0)),
        scratch_shapes=[
            pltpu.VMEM(((H + 2) * W, C), jnp.bfloat16),             # left-shifted halo copy
            pltpu.VMEM(((H + 2) * W, C), jnp.bfloat16),             # center halo copy
            pltpu.VMEM(((H + 2) * W, C), jnp.bfloat16),             # right-shifted halo copy
            pltpu.VMEM((H * W, 8 * C), jnp.bfloat16),               # im2col (taps 0..7)
            pltpu.VMEM((1, C + 2 * p), jnp.float32),                # padded pooled row
        ],
    )
    out = pl.pallas_call(
        efm_kernel,
        out_shape=jax.ShapeDtypeStruct((N, H * W, C), jnp.float32),
        grid_spec=grid_spec,
        compiler_params=pltpu.CompilerParams(
            dimension_semantics=("parallel",)),          # both TensorCores on v7x
    )(c_nhwc, att_nhwc, wka, wkb, bns, bnb, w1d.astype(jnp.float32))
    return out.reshape(N, H, W, C)                       # free, contiguous reshape


if __name__ == "__main__":
    N, C, H, W = 2, 32, 16, 16
    t = int(abs((log(C, 2) + 1) / 2))
    k = t if t % 2 else t + 1            # k = 3 for C = 32

    key = jax.random.PRNGKey(0)
    kc, ka, kw, k1 = jax.random.split(key, 4)
    c = jax.random.normal(kc, (N, H, W, C), jnp.float32)
    att = jax.nn.sigmoid(jax.random.normal(ka, (N, H, W, C), jnp.float32))
    # TODO(synk): the F.interpolate(att, ...) branch for mismatched spatial sizes is
    # not implemented; inputs here share c's spatial size (the common path).

    # --- deterministic parameter init (shapes from EFM.__init__) ---
    w_hwio = jax.random.normal(kw, (3, 3, C, C), jnp.float32) * 0.1   # Conv2d, HWIO
    gamma = 1.0 + 0.05 * jnp.arange(C, dtype=jnp.float32)             # BatchNorm2d
    beta = 0.02 * jnp.arange(C, dtype=jnp.float32)
    run_mean = 0.01 * jnp.arange(C, dtype=jnp.float32)
    run_var = 0.5 + 0.03 * jnp.arange(C, dtype=jnp.float32)
    eps = 1e-5
    # TODO(synk): training-mode batch statistics not modelled; BN folded (eval mode).
    bn_scale = gamma / jnp.sqrt(run_var + eps)
    bn_bias = beta - run_mean * bn_scale
    w1d = jax.random.normal(k1, (k,), jnp.float32) * 0.5              # Conv1d(1,1,k)

    out = efm_pallas(c, att, w_hwio, bn_scale, bn_bias, w1d)          # (N,H,W,C)
    jax.block_until_ready(out)

    # --- pure-JAX reference (same semantics; bf16 conv operands like the kernel) ---
    x = c * att + c
    y = lax.conv_general_dilated(
        x.astype(jnp.bfloat16), w_hwio.astype(jnp.bfloat16),
        (1, 1), ((1, 1), (1, 1)),
        dimension_numbers=('NHWC', 'HWIO', 'NHWC'),
        preferred_element_type=jnp.float32)
    y = jnp.maximum(y * bn_scale + bn_bias, 0.0)
    pooled = jnp.mean(y, axis=(1, 2))                                 # (N, C)
    p = (k - 1) // 2
    wp = jnp.pad(pooled, ((0, 0), (p, p)))
    conv1d = jnp.zeros_like(pooled)
    for j in range(k):
        conv1d = conv1d + w1d[j] * wp[:, j:j + C]
    ref = y * jax.nn.sigmoid(conv1d)[:, None, None, :]

    err = float(jnp.max(jnp.abs(out - ref)))
    assert jnp.allclose(out, ref, rtol=2e-3, atol=2e-3), f"max abs err {err}"
    print("KERNEL_OK")
</pallas_src>

<mosaic_0001>
module attributes {stable_mosaic.version = 11 : i64} {
  func.func @efm_kernel(%arg0: i32, %arg1: memref<1x16x16x32xf32, #tpu.memory_space<vmem>>, %arg2: memref<1x16x16x32xf32, #tpu.memory_space<vmem>>, %arg3: memref<256x32xbf16, #tpu.memory_space<vmem>>, %arg4: memref<32x32xbf16, #tpu.memory_space<vmem>>, %arg5: memref<1x32xf32, #tpu.memory_space<vmem>>, %arg6: memref<1x32xf32, #tpu.memory_space<vmem>>, %arg7: memref<3xf32, #tpu.memory_space<smem>>, %arg8: memref<1x256x32xf32, #tpu.memory_space<vmem>>, %arg9: memref<288x32xbf16, #tpu.memory_space<vmem>>, %arg10: memref<288x32xbf16, #tpu.memory_space<vmem>>, %arg11: memref<288x32xbf16, #tpu.memory_space<vmem>>, %arg12: memref<256x256xbf16, #tpu.memory_space<vmem>>, %arg13: memref<1x34xf32, #tpu.memory_space<vmem>>) attributes {dimension_semantics = [#tpu.dimension_semantics<parallel>], iteration_bounds = array<i64: 2>, scalar_prefetch = 0 : i64, scratch_operands = 5 : i64, tpu.core_type = #tpu.core_type<tc>, window_params = [{transform_indices = @transform_0, window_bounds = array<i64: 1, 16, 16, 32>}, {transform_indices = @transform_1, window_bounds = array<i64: 1, 16, 16, 32>}, {pipeline_mode = #tpu.pipeline_mode<synchronous>, transform_indices = @transform_2, window_bounds = array<i64: 256, 32>}, {pipeline_mode = #tpu.pipeline_mode<synchronous>, transform_indices = @transform_3, window_bounds = array<i64: 32, 32>}, {pipeline_mode = #tpu.pipeline_mode<synchronous>, transform_indices = @transform_4, window_bounds = array<i64: 1, 32>}, {pipeline_mode = #tpu.pipeline_mode<synchronous>, transform_indices = @transform_5, window_bounds = array<i64: 1, 32>}, {transform_indices = @transform_6, window_bounds = array<i64: 3>}, {transform_indices = @transform_7, window_bounds = array<i64: 1, 256, 32>}]} {
    %c0 = arith.constant 0 : index
    %c0_0 = arith.constant 0 : index
    %c0_1 = arith.constant 0 : index
    %c0_2 = arith.constant 0 : index
    %0 = vector.load %arg1[%c0, %c0_0, %c0_1, %c0_2] : memref<1x16x16x32xf32, #tpu.memory_space<vmem>>, vector<1x16x16x32xf32>
    %c0_3 = arith.constant 0 : index
    %c0_4 = arith.constant 0 : index
    %c0_5 = arith.constant 0 : index
    %c0_6 = arith.constant 0 : index
    %1 = vector.load %arg2[%c0_3, %c0_4, %c0_5, %c0_6] : memref<1x16x16x32xf32, #tpu.memory_space<vmem>>, vector<1x16x16x32xf32>
    %2 = arith.mulf %0, %1 : vector<1x16x16x32xf32>
    %c0_7 = arith.constant 0 : index
    %c0_8 = arith.constant 0 : index
    %c0_9 = arith.constant 0 : index
    %c0_10 = arith.constant 0 : index
    %3 = vector.load %arg1[%c0_7, %c0_8, %c0_9, %c0_10] : memref<1x16x16x32xf32, #tpu.memory_space<vmem>>, vector<1x16x16x32xf32>
    %4 = arith.addf %2, %3 : vector<1x16x16x32xf32>
    %5 = vector.shape_cast %4 : vector<1x16x16x32xf32> to vector<256x32xf32>
    %6 = tpu.iota {dimensions = array<i32: 0>} : vector<256x32xi32>
    %c16_i32 = arith.constant 16 : i32
    %c0_i32 = arith.constant 0 : i32
    %7 = arith.cmpi eq, %c16_i32, %c0_i32 : i32
    %c1_i32 = arith.constant 1 : i32
    %8 = arith.select %7, %c1_i32, %c16_i32 : i32
    %9 = vector.broadcast %8 : i32 to vector<256x32xi32>
    %10 = arith.remsi %6, %9 : vector<256x32xi32>
    %c0_i32_11 = arith.constant 0 : i32
    %11 = vector.broadcast %c0_i32_11 : i32 to vector<256x32xi32>
    %12 = arith.cmpi ne, %10, %11 : vector<256x32xi32>
    %c0_i32_12 = arith.constant 0 : i32
    %13 = vector.broadcast %c0_i32_12 : i32 to vector<256x32xi32>
    %14 = arith.cmpi slt, %10, %13 : vector<256x32xi32>
    %c0_i32_13 = arith.constant 0 : i32
    %15 = arith.cmpi slt, %8, %c0_i32_13 : i32
    %16 = vector.broadcast %15 : i1 to vector<256x32xi1>
    %17 = vector.broadcast %16 : vector<256x32xi1> to vector<256x32xi1>
    %18 = arith.xori %14, %17 : vector<256x32xi1>
    %19 = arith.andi %18, %12 : vector<256x32xi1>
    %20 = vector.broadcast %8 : i32 to vector<256x32xi32>
    %21 = arith.addi %10, %20 : vector<256x32xi32>
    %22 = arith.select %19, %21, %10 : vector<256x32xi1>, vector<256x32xi32>
    %cst = arith.constant 0.000000e+00 : f32
    %23 = vector.broadcast %cst : f32 to vector<1x32xf32>
    %c0_i32_14 = arith.constant 0 : i32
    %24 = vector.broadcast %c0_i32_14 : i32 to vector<256x32xi32>
    %25 = arith.cmpi eq, %22, %24 : vector<256x32xi32>
    %26 = vector.extract_strided_slice %5 {offsets = [0, 0], sizes = [255, 32], strides = [1, 1]} : vector<256x32xf32> to vector<255x32xf32>
    %27 = tpu.concatenate %23, %26 in 0 : vector<1x32xf32>, vector<255x32xf32> -> vector<256x32xf32>
    %cst_15 = arith.constant 0.000000e+00 : f32
    %28 = vector.broadcast %cst_15 : f32 to vector<256x32xf32>
    %29 = arith.select %25, %28, %27 : vector<256x32xi1>, vector<256x32xf32>
    %c15_i32 = arith.constant 15 : i32
    %30 = vector.broadcast %c15_i32 : i32 to vector<256x32xi32>
    %31 = arith.cmpi eq, %22, %30 : vector<256x32xi32>
    %32 = vector.extract_strided_slice %5 {offsets = [1, 0], sizes = [255, 32], strides = [1, 1]} : vector<256x32xf32> to vector<255x32xf32>
    %33 = tpu.concatenate %32, %23 in 0 : vector<255x32xf32>, vector<1x32xf32> -> vector<256x32xf32>
    %cst_16 = arith.constant 0.000000e+00 : f32
    %34 = vector.broadcast %cst_16 : f32 to vector<256x32xf32>
    %35 = arith.select %31, %34, %33 : vector<256x32xi1>, vector<256x32xf32>
    %cst_17 = arith.constant 0.000000e+00 : bf16
    %36 = vector.broadcast %cst_17 : bf16 to vector<16x32xbf16>
    %c0_18 = arith.constant 0 : index
    %c0_19 = arith.constant 0 : index
    %37 = vector.load %arg9[%c0_18, %c0_19] : memref<288x32xbf16, #tpu.memory_space<vmem>>, vector<16x32xbf16>
    tpu.vector_store %arg9[%c0_18, %c0_19], %36 {strides = array<i32>} : memref<288x32xbf16, #tpu.memory_space<vmem>>, vector<16x32xbf16>,
    %c272 = arith.constant 272 : index
    %c0_20 = arith.constant 0 : index
    %38 = vector.load %arg9[%c272, %c0_20] : memref<288x32xbf16, #tpu.memory_space<vmem>>, vector<16x32xbf16>
    tpu.vector_store %arg9[%c272, %c0_20], %36 {strides = array<i32>} : memref<288x32xbf16, #tpu.memory_space<vmem>>, vector<16x32xbf16>,
    %39 = arith.truncf %29 : vector<256x32xf32> to vector<256x32xbf16>
    %c16 = arith.constant 16 : index
    %c0_21 = arith.constant 0 : index
    %40 = vector.load %arg9[%c16, %c0_21] : memref<288x32xbf16, #tpu.memory_space<vmem>>, vector<256x32xbf16>
    tpu.vector_store %arg9[%c16, %c0_21], %39 {strides = array<i32>} : memref<288x32xbf16, #tpu.memory_space<vmem>>, vector<256x32xbf16>,
    %c0_22 = arith.constant 0 : index
    %c0_23 = arith.constant 0 : index
    %41 = vector.load %arg10[%c0_22, %c0_23] : memref<288x32xbf16, #tpu.memory_space<vmem>>, vector<16x32xbf16>
    tpu.vector_store %arg10[%c0_22, %c0_23], %36 {strides = array<i32>} : memref<288x32xbf16, #tpu.memory_space<vmem>>, vector<16x32xbf16>,
    %c272_24 = arith.constant 272 : index
    %c0_25 = arith.constant 0 : index
    %42 = vector.load %arg10[%c272_24, %c0_25] : memref<288x32xbf16, #tpu.memory_space<vmem>>, vector<16x32xbf16>
    tpu.vector_store %arg10[%c272_24, %c0_25], %36 {strides = array<i32>} : memref<288x32xbf16, #tpu.memory_space<vmem>>, vector<16x32xbf16>,
    %43 = arith.truncf %5 : vector<256x32xf32> to vector<256x32xbf16>
    %c16_26 = arith.constant 16 : index
    %c0_27 = arith.constant 0 : index
    %44 = vector.load %arg10[%c16_26, %c0_27] : memref<288x32xbf16, #tpu.memory_space<vmem>>, vector<256x32xbf16>
    tpu.vector_store %arg10[%c16_26, %c0_27], %43 {strides = array<i32>} : memref<288x32xbf16, #tpu.memory_space<vmem>>, vector<256x32xbf16>,
    %c0_28 = arith.constant 0 : index
    %c0_29 = arith.constant 0 : index
    %45 = vector.load %arg11[%c0_28, %c0_29] : memref<288x32xbf16, #tpu.memory_space<vmem>>, vector<16x32xbf16>
    tpu.vector_store %arg11[%c0_28, %c0_29], %36 {strides = array<i32>} : memref<288x32xbf16, #tpu.memory_space<vmem>>, vector<16x32xbf16>,
    %c272_30 = arith.constant 272 : index
    %c0_31 = arith.constant 0 : index
    %46 = vector.load %arg11[%c272_30, %c0_31] : memref<288x32xbf16, #tpu.memory_space<vmem>>, vector<16x32xbf16>
    tpu.vector_store %arg11[%c272_30, %c0_31], %36 {strides = array<i32>} : memref<288x32xbf16, #tpu.memory_space<vmem>>, vector<16x32xbf16>,
    %47 = arith.truncf %35 : vector<256x32xf32> to vector<256x32xbf16>
    %c16_32 = arith.constant 16 : index
    %c0_33 = arith.constant 0 : index
    %48 = vector.load %arg11[%c16_32, %c0_33] : memref<288x32xbf16, #tpu.memory_space<vmem>>, vector<256x32xbf16>
    tpu.vector_store %arg11[%c16_32, %c0_33], %47 {strides = array<i32>} : memref<288x32xbf16, #tpu.memory_space<vmem>>, vector<256x32xbf16>,
    %c0_34 = arith.constant 0 : index
    %c0_35 = arith.constant 0 : index
    %49 = vector.load %arg9[%c0_34, %c0_35] : memref<288x32xbf16, #tpu.memory_space<vmem>>, vector<256x32xbf16>
    %c0_36 = arith.constant 0 : index
    %c0_37 = arith.constant 0 : index
    %50 = vector.load %arg10[%c0_36, %c0_37] : memref<288x32xbf16, #tpu.memory_space<vmem>>, vector<256x32xbf16>
    %c0_38 = arith.constant 0 : index
    %c0_39 = arith.constant 0 : index
    %51 = vector.load %arg11[%c0_38, %c0_39] : memref<288x32xbf16, #tpu.memory_space<vmem>>, vector<256x32xbf16>
    %c16_40 = arith.constant 16 : index
    %c0_41 = arith.constant 0 : index
    %52 = vector.load %arg9[%c16_40, %c0_41] : memref<288x32xbf16, #tpu.memory_space<vmem>>, vector<256x32xbf16>
    %53 = tpu.concatenate %49, %50, %51, %52 in 1 : vector<256x32xbf16>, vector<256x32xbf16>, vector<256x32xbf16>, vector<256x32xbf16> -> vector<256x128xbf16>
    %c0_42 = arith.constant 0 : index
    %c0_43 = arith.constant 0 : index
    %54 = vector.load %arg12[%c0_42, %c0_43] : memref<256x256xbf16, #tpu.memory_space<vmem>>, vector<256x128xbf16>
    tpu.vector_store %arg12[%c0_42, %c0_43], %53 {strides = array<i32>} : memref<256x256xbf16, #tpu.memory_space<vmem>>, vector<256x128xbf16>,
    %c16_44 = arith.constant 16 : index
    %c0_45 = arith.constant 0 : index
    %55 = vector.load %arg10[%c16_44, %c0_45] : memref<288x32xbf16, #tpu.memory_space<vmem>>, vector<256x32xbf16>
    %c16_46 = arith.constant 16 : index
    %c0_47 = arith.constant 0 : index
    %56 = vector.load %arg11[%c16_46, %c0_47] : memref<288x32xbf16, #tpu.memory_space<vmem>>, vector<256x32xbf16>
    %c32 = arith.constant 32 : index
    %c0_48 = arith.constant 0 : index
    %57 = vector.load %arg9[%c32, %c0_48] : memref<288x32xbf16, #tpu.memory_space<vmem>>, vector<256x32xbf16>
    %c32_49 = arith.constant 32 : index
    %c0_50 = arith.constant 0 : index
    %58 = vector.load %arg10[%c32_49, %c0_50] : memref<288x32xbf16, #tpu.memory_space<vmem>>, vector<256x32xbf16>
    %59 = tpu.concatenate %55, %56, %57, %58 in 1 : vector<256x32xbf16>, vector<256x32xbf16>, vector<256x32xbf16>, vector<256x32xbf16> -> vector<256x128xbf16>
    %c0_51 = arith.constant 0 : index
    %c128 = arith.constant 128 : index
    %60 = vector.load %arg12[%c0_51, %c128] : memref<256x256xbf16, #tpu.memory_space<vmem>>, vector<256x128xbf16>
    tpu.vector_store %arg12[%c0_51, %c128], %59 {strides = array<i32>} : memref<256x256xbf16, #tpu.memory_space<vmem>>, vector<256x128xbf16>,
    %c0_52 = arith.constant 0 : index
    %c0_53 = arith.constant 0 : index
    %61 = vector.load %arg12[%c0_52, %c0_53] : memref<256x256xbf16, #tpu.memory_space<vmem>>, vector<256x256xbf16>
    %c0_54 = arith.constant 0 : index
    %c0_55 = arith.constant 0 : index
    %62 = vector.load %arg3[%c0_54, %c0_55] : memref<256x32xbf16, #tpu.memory_space<vmem>>, vector<256x32xbf16>
    %cst_56 = arith.constant dense<0.000000e+00> : vector<256x32xf32>
    %63 = tpu.matmul %61, %62, %cst_56 {dimension_numbers = #tpu.dot_dimension_numbers<[1], [0], [0], [1], [0, 0, 1, 1], [], []>} : vector<256x256xbf16>, vector<256x32xbf16>, vector<256x32xf32> -> vector<256x32xf32>
    %c32_57 = arith.constant 32 : index
    %c0_58 = arith.constant 0 : index
    %64 = vector.load %arg11[%c32_57, %c0_58] : memref<288x32xbf16, #tpu.memory_space<vmem>>, vector<256x32xbf16>
    %c0_59 = arith.constant 0 : index
    %c0_60 = arith.constant 0 : index
    %65 = vector.load %arg4[%c0_59, %c0_60] : memref<32x32xbf16, #tpu.memory_space<vmem>>, vector<32x32xbf16>
    %cst_61 = arith.constant dense<0.000000e+00> : vector<256x32xf32>
    %66 = tpu.matmul %64, %65, %cst_61 {dimension_numbers = #tpu.dot_dimension_numbers<[1], [0], [0], [1], [0, 0, 1, 1], [], []>} : vector<256x32xbf16>, vector<32x32xbf16>, vector<256x32xf32> -> vector<256x32xf32>
    %67 = arith.addf %63, %66 : vector<256x32xf32>
    %c0_62 = arith.constant 0 : index
    %c0_63 = arith.constant 0 : index
    %68 = vector.load %arg5[%c0_62, %c0_63] : memref<1x32xf32, #tpu.memory_space<vmem>>, vector<1x32xf32>
    %69 = vector.broadcast %68 : vector<1x32xf32> to vector<256x32xf32>
    %70 = arith.mulf %67, %69 : vector<256x32xf32>
    %c0_64 = arith.constant 0 : index
    %c0_65 = arith.constant 0 : index
    %71 = vector.load %arg6[%c0_64, %c0_65] : memref<1x32xf32, #tpu.memory_space<vmem>>, vector<1x32xf32>
    %72 = vector.broadcast %71 : vector<1x32xf32> to vector<256x32xf32>
    %73 = arith.addf %70, %72 : vector<256x32xf32>
    %cst_66 = arith.constant 0.000000e+00 : f32
    %74 = vector.broadcast %cst_66 : f32 to vector<256x32xf32>
    %75 = arith.maximumf %73, %74 : vector<256x32xf32>
    %cst_67 = arith.constant dense<0.000000e+00> : vector<32xf32>
    %76 = vector.multi_reduction <add>, %75, %cst_67 [0] : vector<256x32xf32> to vector<32xf32>
    %77 = vector.shape_cast %76 : vector<32xf32> to vector<1x32xf32>
    %cst_68 = arith.constant 2.560000e+02 : f32
    %78 = vector.broadcast %cst_68 : f32 to vector<1x32xf32>
    %79 = arith.divf %77, %78 : vector<1x32xf32>
    %cst_69 = arith.constant 0.000000e+00 : f32
    %80 = vector.broadcast %cst_69 : f32 to vector<1x34xf32>
    %c0_70 = arith.constant 0 : index
    %c0_71 = arith.constant 0 : index
    %81 = vector.load %arg13[%c0_70, %c0_71] : memref<1x34xf32, #tpu.memory_space<vmem>>, vector<1x34xf32>
    tpu.vector_store %arg13[%c0_70, %c0_71], %80 {strides = array<i32>} : memref<1x34xf32, #tpu.memory_space<vmem>>, vector<1x34xf32>,
    %c0_72 = arith.constant 0 : index
    %c1 = arith.constant 1 : index
    %82 = vector.load %arg13[%c0_72, %c1] : memref<1x34xf32, #tpu.memory_space<vmem>>, vector<1x32xf32>
    tpu.vector_store %arg13[%c0_72, %c1], %79 {strides = array<i32>} : memref<1x34xf32, #tpu.memory_space<vmem>>, vector<1x32xf32>,
    %c0_73 = arith.constant 0 : index
    %83 = memref.load %arg7[%c0_73] : memref<3xf32, #tpu.memory_space<smem>>
    %c0_74 = arith.constant 0 : index
    %c0_75 = arith.constant 0 : index
    %84 = vector.load %arg13[%c0_74, %c0_75] : memref<1x34xf32, #tpu.memory_space<vmem>>, vector<1x32xf32>
    %85 = vector.broadcast %83 : f32 to vector<1x32xf32>
    %86 = arith.mulf %85, %84 : vector<1x32xf32>
    %c1_76 = arith.constant 1 : index
    %87 = memref.load %arg7[%c1_76] : memref<3xf32, #tpu.memory_space<smem>>
    %c0_77 = arith.constant 0 : index
    %c1_78 = arith.constant 1 : index
    %88 = vector.load %arg13[%c0_77, %c1_78] : memref<1x34xf32, #tpu.memory_space<vmem>>, vector<1x32xf32>
    %89 = vector.broadcast %87 : f32 to vector<1x32xf32>
    %90 = arith.mulf %89, %88 : vector<1x32xf32>
    %91 = arith.addf %86, %90 : vector<1x32xf32>
    %c2 = arith.constant 2 : index
    %92 = memref.load %arg7[%c2] : memref<3xf32, #tpu.memory_space<smem>>
    %c0_79 = arith.constant 0 : index
    %c2_80 = arith.constant 2 : index
    %93 = vector.load %arg13[%c0_79, %c2_80] : memref<1x34xf32, #tpu.memory_space<vmem>>, vector<1x32xf32>
    %94 = vector.broadcast %92 : f32 to vector<1x32xf32>
    %95 = arith.mulf %94, %93 : vector<1x32xf32>
    %96 = arith.addf %91, %95 : vector<1x32xf32>
    %97 = arith.negf %96 : vector<1x32xf32>
    %98 = math.exp %97 : vector<1x32xf32>
    %cst_81 = arith.constant 1.000000e+00 : f32
    %99 = vector.broadcast %cst_81 : f32 to vector<1x32xf32>
    %100 = arith.addf %99, %98 : vector<1x32xf32>
    %101 = arith.divf %99, %100 : vector<1x32xf32>
    %102 = vector.broadcast %101 : vector<1x32xf32> to vector<256x32xf32>
    %103 = arith.mulf %75, %102 : vector<256x32xf32>
    %104 = vector.shape_cast %103 : vector<256x32xf32> to vector<1x256x32xf32>
    %c0_82 = arith.constant 0 : index
    %c0_83 = arith.constant 0 : index
    %c0_84 = arith.constant 0 : index
    %105 = vector.load %arg8[%c0_82, %c0_83, %c0_84] : memref<1x256x32xf32, #tpu.memory_space<vmem>>, vector<1x256x32xf32>
    tpu.vector_store %arg8[%c0_82, %c0_83, %c0_84], %104 {strides = array<i32>} : memref<1x256x32xf32, #tpu.memory_space<vmem>>, vector<1x256x32xf32>,
    return
  }
  func.func @transform_0(%arg0: i32) -> (i32, i32, i32, i32) {
    %c0_i32 = arith.constant 0 : i32
    %c0_i32_0 = arith.constant 0 : i32
    %c0_i32_1 = arith.constant 0 : i32
    %c0_i32_2 = arith.constant 0 : i32
    return %arg0, %c0_i32, %c0_i32_0, %c0_i32_1 : i32, i32, i32, i32
  }
  func.func @transform_1(%arg0: i32) -> (i32, i32, i32, i32) {
    %c0_i32 = arith.constant 0 : i32
    %c0_i32_0 = arith.constant 0 : i32
    %c0_i32_1 = arith.constant 0 : i32
    %c0_i32_2 = arith.constant 0 : i32
    return %arg0, %c0_i32, %c0_i32_0, %c0_i32_1 : i32, i32, i32, i32
  }
  func.func @transform_2(%arg0: i32) -> (i32, i32) {
    %c0_i32 = arith.constant 0 : i32
    %c0_i32_0 = arith.constant 0 : i32
    %c0_i32_1 = arith.constant 0 : i32
    return %c0_i32, %c0_i32_0 : i32, i32
  }
  func.func @transform_3(%arg0: i32) -> (i32, i32) {
    %c0_i32 = arith.constant 0 : i32
    %c0_i32_0 = arith.constant 0 : i32
    %c0_i32_1 = arith.constant 0 : i32
    return %c0_i32, %c0_i32_0 : i32, i32
  }
  func.func @transform_4(%arg0: i32) -> (i32, i32) {
    %c0_i32 = arith.constant 0 : i32
    %c0_i32_0 = arith.constant 0 : i32
    %c0_i32_1 = arith.constant 0 : i32
    return %c0_i32, %c0_i32_0 : i32, i32
  }
  func.func @transform_5(%arg0: i32) -> (i32, i32) {
    %c0_i32 = arith.constant 0 : i32
    %c0_i32_0 = arith.constant 0 : i32
    %c0_i32_1 = arith.constant 0 : i32
    return %c0_i32, %c0_i32_0 : i32, i32
  }
  func.func @transform_6(%arg0: i32) -> i32 {
    %c0_i32 = arith.constant 0 : i32
    %c0_i32_0 = arith.constant 0 : i32
    return %c0_i32 : i32
  }
  func.func @transform_7(%arg0: i32) -> (i32, i32, i32) {
    %c0_i32 = arith.constant 0 : i32
    %c0_i32_0 = arith.constant 0 : i32
    %c0_i32_1 = arith.constant 0 : i32
    return %arg0, %c0_i32, %c0_i32_0 : i32, i32, i32
  }
}

</mosaic_0001>

<llo_original>
// kernel: tpu_custom_call.1
$region0: #{tpu_custom_call.1}
  #allocation0 [shape = 'u32[]', space=smem, size = 0x4, offset = 0x4, fixed_abs, tag = 'smem constant byte address 0x4 - core index']
  #allocation1 [shape = 'u32[144,128]{1,0:T(1,128)}', space=vmem, size = 0x12000, scoped, tag = 'internal scratch']
  #allocation2 [shape = 'bf16[288,32]{1,0:T(16,128)(2,1)}', space=vmem, size = 0x12000, scoped, tag = 'scratch operand']
  #allocation3 [shape = 'bf16[288,32]{1,0:T(16,128)(2,1)}', space=vmem, size = 0x12000, scoped, tag = 'scratch operand']
  #allocation4 [shape = 'bf16[288,32]{1,0:T(16,128)(2,1)}', space=vmem, size = 0x12000, scoped, tag = 'scratch operand']
  #allocation5 [shape = 'bf16[256,256]{1,0:T(16,128)(2,1)}', space=vmem, size = 0x20000, scoped, tag = 'scratch operand']
  #allocation6 [shape = 'f32[1,34]{1,0:T(1,128)}', space=vmem, size = 0x200, scoped, tag = 'scratch operand']
  %s0 = inlined_call_operand.hbm [shape: f32[2,16,16,32], index: 0, kind: input, shape index: {}]
  %s1 = inlined_call_operand.hbm [shape: f32[2,16,16,32], index: 1, kind: input, shape index: {}]
  %s2 = inlined_call_operand.vmem [shape: bf16[256,32], index: 2, kind: input, shape index: {}]
  %s3 = inlined_call_operand.vmem [shape: bf16[32,32], index: 3, kind: input, shape index: {}]
  %s4 = inlined_call_operand.vmem [shape: f32[1,32], index: 4, kind: input, shape index: {}]
  %s5 = inlined_call_operand.vmem [shape: f32[1,32], index: 5, kind: input, shape index: {}]
  %s6 = inlined_call_operand.vmem [shape: f32[3], index: 6, kind: input, shape index: {}]
  %s7 = inlined_call_operand.vmem [shape: f32[2,256,32], index: 7, kind: output, shape index: {}]
  %s8 = sld [smem:[#allocation0]]
  $region73: #{tpu_custom_call.1} parent=0
    _
  %s10 = ssub.s32 1, %s8
  %s11 = scalar_select 0, %s10, %s8
  $region1: #{tpu_custom_call.1} parent=0
    #allocation7 [shape = 'u8[262144]{0}', space=vmem, size = 0x40000, scoped, tag = 'input window, operand 0']
    #allocation8 [shape = 's32[2]{0}', space=sflag, size = 0x8, scoped, tag = 'scoped memory for tpu_custom_call.1']
    #allocation9 [shape = 's32[2]{0}', space=sflag, size = 0x8, scoped, tag = 'scoped memory for tpu_custom_call.1']
    #allocation10 [shape = 'u8[262144]{0}', space=vmem, size = 0x40000, scoped, tag = 'input window, operand 1']
    #allocation11 [shape = 's32[2]{0}', space=sflag, size = 0x8, scoped, tag = 'scoped memory for tpu_custom_call.1']
    #allocation12 [shape = 'u8[512]{0}', space=smem, size = 0x200, scoped, tag = 'input window, operand 6, single buffered']
    %12 = vsyncpa [#allocation8], 0
    %s13 = scalar_lea.sflag [#allocation8], 1
    %14 = vsyncpa %s13, 0
    %15 = vsyncpa [#allocation11], 0
    %s16 = scalar_lea.sflag [#allocation11], 1
    %17 = vsyncpa %s16, 0
    %18 = vsyncpa [#allocation9], 0
    loop: start=0, step=1, limit=4
    $region2: #{tpu_custom_call.1} parent=1 // loop_pre_header
      _
    $region3: #{tpu_custom_call.1} parent=1 // loop_header
      %s20 = sphi 0, %s24
      %p21 = scmp.ge.s32.totalorder %s20, 4
      %s30 = sphi 0, %s32
      %s33 = sphi 0, %s30
      %s34 = sphi 0, %s33
      %s50 = sphi 0, %s34
      %s56 = sphi 0, %s58
      %s59 = sphi 0, %s56
      %s60 = sphi 0, %s59
      %s76 = sphi 0, %s60
      %s80 = sphi 0, %s80
      %s82 = sphi 0, %s80
      %s83 = sphi 0, %s82
      %s97 = sphi 0, %s83
      %s101 = sphi 0, %s101
      %s103 = sphi 0, %s101
      %s104 = sphi 0, %s103
      %s118 = sphi 0, %s104
      %s122 = sphi 0, %s122
      %s124 = sphi 0, %s122
      %s125 = sphi 0, %s124
      %s139 = sphi 0, %s125
      %s143 = sphi 0, %s143
      %s145 = sphi 0, %s143
      %s146 = sphi 0, %s145
      %s160 = sphi 0, %s146
      %s164 = sphi 0, %s164
      %s166 = sphi 0, %s164
      %s167 = sphi 0, %s166
      %s181 = sphi 0, %s167
      %s187 = sphi 0, %s189
      %s190 = sphi 0, %s187
      %s191 = sphi 0, %s190
      %s207 = sphi 0, %s191
    $region4: #{tpu_custom_call.1} parent=1 // loop_header_branch
      %23 = sbr.rel (%p21) target = $region8
    $region5: #{tpu_custom_call.1} parent=1 // loop_body
      %s25 = ssub.s32 %s20, 1
      %s26 = ssub.s32 %s20, 2
      %s27 = sadd.s32 %s20, 1
      %s28 = ssub.s32 %s20, %s27
      %p29 = scmp.eq.s32.totalorder %s28, 0
      %s31 = sadd.s32 %s30, 1
      %s32 = scalar_select %p29, %s30, %s31
      %p35 = pneg %p29
      %p36 = scmp.eq.s32.totalorder %s20, 1
      %p37 = por %p35, %p36
      %p38 = scmp.ne.s32.totalorder %s30, %s33
      %p39 = scmp.eq.s32.totalorder %s20, 0
      %p40 = por %p38, %p39
      %p41 = scmp.ne.s32.totalorder %s30, %s33
      %p42 = scmp.eq.s32.totalorder %s25, 1
      %p43 = por %p41, %p42
      %p44 = scmp.ne.s32.totalorder %s33, %s34
      %p45 = scmp.eq.s32.totalorder %s25, 0
      %p46 = por %p44, %p45
      %p47 = scmp.ne.s32.totalorder %s33, %s34
      %p48 = scmp.eq.s32.totalorder %s26, 1
      %p49 = por %p47, %p48
      %p51 = scmp.ne.s32.totalorder %s34, %s50
      %p52 = scmp.eq.s32.totalorder %s26, 0
      %p53 = por %p51, %p52
      %s54 = ssub.s32 %s20, %s27
      %p55 = scmp.eq.s32.totalorder %s54, 0
      %s57 = sadd.s32 %s56, 1
      %s58 = scalar_select %p55, %s56, %s57
      %p61 = pneg %p55
      %p62 = scmp.eq.s32.totalorder %s20, 1
      %p63 = por %p61, %p62
      %p64 = scmp.ne.s32.totalorder %s56, %s59
      %p65 = scmp.eq.s32.totalorder %s20, 0
      %p66 = por %p64, %p65
      %p67 = scmp.ne.s32.totalorder %s56, %s59
      %p68 = scmp.eq.s32.totalorder %s25, 1
      %p69 = por %p67, %p68
      %p70 = scmp.ne.s32.totalorder %s59, %s60
      %p71 = scmp.eq.s32.totalorder %s25, 0
      %p72 = por %p70, %p71
      %p73 = scmp.ne.s32.totalorder %s59, %s60
      %p74 = scmp.eq.s32.totalorder %s26, 1
      %p75 = por %p73, %p74
      %p77 = scmp.ne.s32.totalorder %s60, %s76
      %p78 = scmp.eq.s32.totalorder %s26, 0
      %p79 = por %p77, %p78
      %s81 = sadd.s32 %s80, 1
      %p84 = scmp.eq.s32.totalorder %s20, 1
      %p85 = scmp.ne.s32.totalorder %s80, %s82
      %p86 = scmp.eq.s32.totalorder %s20, 0
      %p87 = por %p85, %p86
      %p88 = scmp.ne.s32.totalorder %s80, %s82
      %p89 = scmp.eq.s32.totalorder %s25, 1
      %p90 = por %p88, %p89
      %p91 = scmp.ne.s32.totalorder %s82, %s83
      %p92 = scmp.eq.s32.totalorder %s25, 0
      %p93 = por %p91, %p92
      %p94 = scmp.ne.s32.totalorder %s82, %s83
      %p95 = scmp.eq.s32.totalorder %s26, 1
      %p96 = por %p94, %p95
      %p98 = scmp.ne.s32.totalorder %s83, %s97
      %p99 = scmp.eq.s32.totalorder %s26, 0
      %p100 = por %p98, %p99
      %s102 = sadd.s32 %s101, 1
      %p105 = scmp.eq.s32.totalorder %s20, 1
      %p106 = scmp.ne.s32.totalorder %s101, %s103
      %p107 = scmp.eq.s32.totalorder %s20, 0
      %p108 = por %p106, %p107
      %p109 = scmp.ne.s32.totalorder %s101, %s103
      %p110 = scmp.eq.s32.totalorder %s25, 1
      %p111 = por %p109, %p110
      %p112 = scmp.ne.s32.totalorder %s103, %s104
      %p113 = scmp.eq.s32.totalorder %s25, 0
      %p114 = por %p112, %p113
      %p115 = scmp.ne.s32.totalorder %s103, %s104
      %p116 = scmp.eq.s32.totalorder %s26, 1
      %p117 = por %p115, %p116
      %p119 = scmp.ne.s32.totalorder %s104, %s118
      %p120 = scmp.eq.s32.totalorder %s26, 0
      %p121 = por %p119, %p120
      %s123 = sadd.s32 %s122, 1
      %p126 = scmp.eq.s32.totalorder %s20, 1
      %p127 = scmp.ne.s32.totalorder %s122, %s124
      %p128 = scmp.eq.s32.totalorder %s20, 0
      %p129 = por %p127, %p128
      %p130 = scmp.ne.s32.totalorder %s122, %s124
      %p131 = scmp.eq.s32.totalorder %s25, 1
      %p132 = por %p130, %p131
      %p133 = scmp.ne.s32.totalorder %s124, %s125
      %p134 = scmp.eq.s32.totalorder %s25, 0
      %p135 = por %p133, %p134
      %p136 = scmp.ne.s32.totalorder %s124, %s125
      %p137 = scmp.eq.s32.totalorder %s26, 1
      %p138 = por %p136, %p137
      %p140 = scmp.ne.s32.totalorder %s125, %s139
      %p141 = scmp.eq.s32.totalorder %s26, 0
      %p142 = por %p140, %p141
      %s144 = sadd.s32 %s143, 1
      %p147 = scmp.eq.s32.totalorder %s20, 1
      %p148 = scmp.ne.s32.totalorder %s143, %s145
      %p149 = scmp.eq.s32.totalorder %s20, 0
      %p150 = por %p148, %p149
      %p151 = scmp.ne.s32.totalorder %s143, %s145
      %p152 = scmp.eq.s32.totalorder %s25, 1
      %p153 = por %p151, %p152
      %p154 = scmp.ne.s32.totalorder %s145, %s146
      %p155 = scmp.eq.s32.totalorder %s25, 0
      %p156 = por %p154, %p155
      %p157 = scmp.ne.s32.totalorder %s145, %s146
      %p158 = scmp.eq.s32.totalorder %s26, 1
      %p159 = por %p157, %p158
      %p161 = scmp.ne.s32.totalorder %s146, %s160
      %p162 = scmp.eq.s32.totalorder %s26, 0
      %p163 = por %p161, %p162
      %s165 = sadd.s32 %s164, 1
      %p168 = scmp.eq.s32.totalorder %s20, 1
      %p169 = scmp.ne.s32.totalorder %s164, %s166
      %p170 = scmp.eq.s32.totalorder %s20, 0
      %p171 = por %p169, %p170
      %p172 = scmp.ne.s32.totalorder %s164, %s166
      %p173 = scmp.eq.s32.totalorder %s25, 1
      %p174 = por %p172, %p173
      %p175 = scmp.ne.s32.totalorder %s166, %s167
      %p176 = scmp.eq.s32.totalorder %s25, 0
      %p177 = por %p175, %p176
      %p178 = scmp.ne.s32.totalorder %s166, %s167
      %p179 = scmp.eq.s32.totalorder %s26, 1
      %p180 = por %p178, %p179
      %p182 = scmp.ne.s32.totalorder %s167, %s181
      %p183 = scmp.eq.s32.totalorder %s26, 0
      %p184 = por %p182, %p183
      %s185 = ssub.s32 %s20, %s27
      %p186 = scmp.eq.s32.totalorder %s185, 0
      %s188 = sadd.s32 %s187, 1
      %s189 = scalar_select %p186, %s187, %s188
      %p192 = pneg %p186
      %p193 = scmp.eq.s32.totalorder %s20, 1
      %p194 = por %p192, %p193
      %p195 = scmp.ne.s32.totalorder %s187, %s190
      %p196 = scmp.eq.s32.totalorder %s20, 0
      %p197 = por %p195, %p196
      %p198 = scmp.ne.s32.totalorder %s187, %s190
      %p199 = scmp.eq.s32.totalorder %s25, 1
      %p200 = por %p198, %p199
      %p201 = scmp.ne.s32.totalorder %s190, %s191
      %p202 = scmp.eq.s32.totalorder %s25, 0
      %p203 = por %p201, %p202
      %p204 = scmp.ne.s32.totalorder %s190, %s191
      %p205 = scmp.eq.s32.totalorder %s26, 1
      %p206 = por %p204, %p205
      %p208 = scmp.ne.s32.totalorder %s191, %s207
      %p209 = scmp.eq.s32.totalorder %s26, 0
      %p210 = por %p208, %p209
      %p211 = scmp.le.s32.totalorder 1, %s20
      %p212 = scmp.lt.s32.totalorder %s20, 3
      %p213 = pnand %p211, %p212
      %p214 = pneg %p213
      // Predicated region
      $region9: #{tpu_custom_call.1} parent=5 // pred_check
        _
      $region10: #{tpu_custom_call.1} parent=5 // pred_check_branch
        %216 = sbr.rel (%p213) target = $region12
      $region11: #{tpu_custom_call.1} parent=5 // pred_region
        %s217 = ssub.s32 %s20, 1
        // Predicated region
        $region13: #{tpu_custom_call.1} parent=11 // pred_check
          %p218 = pneg %p93
        $region14: #{tpu_custom_call.1} parent=11 // pred_check_branch
          %220 = sbr.rel (%p218) target = $region16
        $region15: #{tpu_custom_call.1} parent=11 // pred_region
          _
        $region16: #{tpu_custom_call.1} parent=11 // pred_fallthru
          _
        // Predicated region
        $region17: #{tpu_custom_call.1} parent=11 // pred_check
          %p221 = pneg %p114
        $region18: #{tpu_custom_call.1} parent=11 // pred_check_branch
          %223 = sbr.rel (%p221) target = $region20
        $region19: #{tpu_custom_call.1} parent=11 // pred_region
          _
        $region20: #{tpu_custom_call.1} parent=11 // pred_fallthru
          _
        // Predicated region
        $region21: #{tpu_custom_call.1} parent=11 // pred_check
          %p224 = pneg %p135
        $region22: #{tpu_custom_call.1} parent=11 // pred_check_branch
          %226 = sbr.rel (%p224) target = $region24
        $region23: #{tpu_custom_call.1} parent=11 // pred_region
          _
        $region24: #{tpu_custom_call.1} parent=11 // pred_fallthru
          _
        // Predicated region
        $region25: #{tpu_custom_call.1} parent=11 // pred_check
          %p227 = pneg %p156
        $region26: #{tpu_custom_call.1} parent=11 // pred_check_branch
          %229 = sbr.rel (%p227) target = $region28
        $region27: #{tpu_custom_call.1} parent=11 // pred_region
          _
        $region28: #{tpu_custom_call.1} parent=11 // pred_fallthru
          _
        // Predicated region
        $region29: #{tpu_custom_call.1} parent=11 // pred_check
          %p230 = pneg %p177
        $region30: #{tpu_custom_call.1} parent=11 // pred_check_branch
          %232 = sbr.rel (%p230) target = $region32
        $region31: #{tpu_custom_call.1} parent=11 // pred_region
          %s234 = ssub.s32 16, 16
          %235 = vsyncadd [#allocation9], %s234
          %s237 = sshll.u32 %s6, 4
          %s238 = int_to_ptr.vmem [resolvable:$true] %s237
          %240 = dma.vmem_to_smem %s238, 16, [#allocation12], [#allocation9]
        $region32: #{tpu_custom_call.1} parent=11 // pred_fallthru
          _
      $region12: #{tpu_custom_call.1} parent=5 // pred_fallthru
        _
      %p241 = scmp.lt.s32.totalorder %s20, 2
      // Predicated region
      $region33: #{tpu_custom_call.1} parent=5 // pred_check
        %p242 = pneg %p241
      $region34: #{tpu_custom_call.1} parent=5 // pred_check_branch
        %244 = sbr.rel (%p242) target = $region36
      $region35: #{tpu_custom_call.1} parent=5 // pred_region
        // Predicated region
        $region37: #{tpu_custom_call.1} parent=35 // pred_check
          %p245 = pneg %p40
        $region38: #{tpu_custom_call.1} parent=35 // pred_check_branch
          %247 = sbr.rel (%p245) target = $region40
        $region39: #{tpu_custom_call.1} parent=35 // pred_region
          %s248 = sand.u32 %s30, 1
          %s249 = scalar_lea.sflag [#allocation8], %s248
          %s250 = sand.u32 %s30, 1
          %s251 = smul.addr %s250, 256
          %s252 = scalar_lea.vmem [#allocation7], %s251
          %s254 = ssub.s32 4096, 4096
          %255 = vsyncadd %s249, %s254
          %s256 = smul.addr %s20, 32
          %s257 = smul.addr %s256, 128
          %s258 = scalar_lea.hbm %s0, %s257
          %s259 = sshll.u32 %s252, 4
          %s260 = int_to_ptr.vmem [resolvable:$true] %s259
          %265 = dma.hbm_to_vmem [thread:$0]  %s258, 4096, %s260, %s249, 128, 128, 8
        $region40: #{tpu_custom_call.1} parent=35 // pred_fallthru
          _
        // Predicated region
        $region41: #{tpu_custom_call.1} parent=35 // pred_check
          %p266 = pneg %p66
        $region42: #{tpu_custom_call.1} parent=35 // pred_check_branch
          %268 = sbr.rel (%p266) target = $region44
        $region43: #{tpu_custom_call.1} parent=35 // pred_region
          %s269 = sand.u32 %s56, 1
          %s270 = scalar_lea.sflag [#allocation11], %s269
          %s271 = sand.u32 %s56, 1
          %s272 = smul.addr %s271, 256
          %s273 = scalar_lea.vmem [#allocation10], %s272
          %s275 = ssub.s32 4096, 4096
          %276 = vsyncadd %s270, %s275
          %s277 = smul.addr %s20, 32
          %s278 = smul.addr %s277, 128
          %s279 = scalar_lea.hbm %s1, %s278
          %s280 = sshll.u32 %s273, 4
          %s281 = int_to_ptr.vmem [resolvable:$true] %s280
          %286 = dma.hbm_to_vmem [thread:$0]  %s279, 4096, %s281, %s270, 128, 128, 8
        $region44: #{tpu_custom_call.1} parent=35 // pred_fallthru
          _
      $region36: #{tpu_custom_call.1} parent=5 // pred_fallthru
        _
      %p287 = scmp.le.s32.totalorder 1, %s20
      %p288 = scmp.lt.s32.totalorder %s20, 3
      %p289 = pnand %p287, %p288
      %p290 = pneg %p289
      // Predicated region
      $region45: #{tpu_custom_call.1} parent=5 // pred_check
        _
      $region46: #{tpu_custom_call.1} parent=5 // pred_check_branch
        %292 = sbr.rel (%p289) target = $region48
      $region47: #{tpu_custom_call.1} parent=5 // pred_region
        %s293 = ssub.s32 %s20, 1
        %s294 = sand.u32 %s33, 1
        %s295 = scalar_lea.sflag [#allocation8], %s294
        %s296 = sand.u32 %s33, 1
        %s297 = smul.addr %s296, 256
        %s298 = scalar_lea.vmem [#allocation7], %s297
        // Predicated region
        $region49: #{tpu_custom_call.1} parent=47 // pred_check
          %p299 = pneg %p46
        $region50: #{tpu_custom_call.1} parent=47 // pred_check_branch
          %301 = sbr.rel (%p299) target = $region52
        $region51: #{tpu_custom_call.1} parent=47 // pred_region
          %302 = dma.done %s295, 4096
        $region52: #{tpu_custom_call.1} parent=47 // pred_fallthru
          _
        %s303 = sand.u32 %s59, 1
        %s304 = scalar_lea.sflag [#allocation11], %s303
        %s305 = sand.u32 %s59, 1
        %s306 = smul.addr %s305, 256
        %s307 = scalar_lea.vmem [#allocation10], %s306
        // Predicated region
        $region53: #{tpu_custom_call.1} parent=47 // pred_check
          %p308 = pneg %p72
        $region54: #{tpu_custom_call.1} parent=47 // pred_check_branch
          %310 = sbr.rel (%p308) target = $region56
        $region55: #{tpu_custom_call.1} parent=47 // pred_region
          %311 = dma.done %s304, 4096
        $region56: #{tpu_custom_call.1} parent=47 // pred_fallthru
          _
        // Predicated region
        $region57: #{tpu_custom_call.1} parent=47 // pred_check
          %p312 = pneg %p177
        $region58: #{tpu_custom_call.1} parent=47 // pred_check_branch
          %314 = sbr.rel (%p312) target = $region60
        $region59: #{tpu_custom_call.1} parent=47 // pred_region
          %315 = dma.done [#allocation9], 16
        $region60: #{tpu_custom_call.1} parent=47 // pred_fallthru
          _
        %316 = sfence
        %s317 = sand.u32 %s33, 1
        %s318 = scalar_lea.sflag [#allocation8], %s317
        %s319 = sand.u32 %s33, 1
        %s320 = smul.addr %s319, 256
        %s321 = scalar_lea.vmem [#allocation7], %s320
        %p322 = pneg %p46
        %p323 = pneg %p43
        %s324 = sand.u32 %s59, 1
        %s325 = scalar_lea.sflag [#allocation11], %s324
        %s326 = sand.u32 %s59, 1
        %s327 = smul.addr %s326, 256
        %s328 = scalar_lea.vmem [#allocation10], %s327
        %p329 = pneg %p72
        %p330 = pneg %p69
        %p331 = pneg %p93
        %p332 = pneg %p90
        %p333 = pneg %p114
        %p334 = pneg %p111
        %p335 = pneg %p135
        %p336 = pneg %p132
        %p337 = pneg %p156
        %p338 = pneg %p153
        %p339 = pneg %p177
        %p340 = pneg %p174
        %p341 = pneg %p203
        %p342 = pneg %p200
        %p343 = scmp.lt.s32.totalorder %s25, 1
        %s344 = scalar_select %p343, %s25, 1
        %s345 = smul.addr %s344, 32
        %s346 = smul.addr %s345, 8
        %s347 = scalar_lea.vmem %s7, %s346
        %p348 = scmp.lt.s32.totalorder %s25, 1
        %s349 = scalar_select %p348, %s25, 1
        %s350 = smul.addr %s349, 32
        %s351 = smul.addr %s350, 8
        %s352 = scalar_lea.vmem %s7, %s351
        %v354 = vld [vmem:[%s298] sm:$0xff]
        %v355 = vld [vmem:[%s298 + $0x8] sm:$0xff]
        %v356 = vld [vmem:[%s298 + $0x10] sm:$0xff]
        %v357 = vld [vmem:[%s298 + $0x18] sm:$0xff]
        %v358 = vld [vmem:[%s298 + $0x20] sm:$0xff]
        %v359 = vld [vmem:[%s298 + $0x28] sm:$0xff]
        %v360 = vld [vmem:[%s298 + $0x30] sm:$0xff]
        %v361 = vld [vmem:[%s298 + $0x38] sm:$0xff]
        %v362 = vld [vmem:[%s298 + $0x40] sm:$0xff]
        %v363 = vld [vmem:[%s298 + $0x48] sm:$0xff]
        %v364 = vld [vmem:[%s298 + $0x50] sm:$0xff]
        %v365 = vld [vmem:[%s298 + $0x58] sm:$0xff]
        %v366 = vld [vmem:[%s298 + $0x60] sm:$0xff]
        %v367 = vld [vmem:[%s298 + $0x68] sm:$0xff]
        %v368 = vld [vmem:[%s298 + $0x70] sm:$0xff]
        %v369 = vld [vmem:[%s298 + $0x78] sm:$0xff]
        %v370 = vld [vmem:[%s298 + $0x80] sm:$0xff]
        %v371 = vld [vmem:[%s298 + $0x88] sm:$0xff]
        %v372 = vld [vmem:[%s298 + $0x90] sm:$0xff]
        %v373 = vld [vmem:[%s298 + $0x98] sm:$0xff]
        %v374 = vld [vmem:[%s298 + $0xa0] sm:$0xff]
        %v375 = vld [vmem:[%s298 + $0xa8] sm:$0xff]
        %v376 = vld [vmem:[%s298 + $0xb0] sm:$0xff]
        %v377 = vld [vmem:[%s298 + $0xb8] sm:$0xff]
        %v378 = vld [vmem:[%s298 + $0xc0] sm:$0xff]
        %v379 = vld [vmem:[%s298 + $0xc8] sm:$0xff]
        %v380 = vld [vmem:[%s298 + $0xd0] sm:$0xff]
        %v381 = vld [vmem:[%s298 + $0xd8] sm:$0xff]
        %v382 = vld [vmem:[%s298 + $0xe0] sm:$0xff]
        %v383 = vld [vmem:[%s298 + $0xe8] sm:$0xff]
        %v384 = vld [vmem:[%s298 + $0xf0] sm:$0xff]
        %v385 = vld [vmem:[%s298 + $0xf8] sm:$0xff]
        %v386 = vld [vmem:[%s307] sm:$0xff]
        %v387 = vld [vmem:[%s307 + $0x8] sm:$0xff]
        %v388 = vld [vmem:[%s307 + $0x10] sm:$0xff]
        %v389 = vld [vmem:[%s307 + $0x18] sm:$0xff]
        %v390 = vld [vmem:[%s307 + $0x20] sm:$0xff]
        %v391 = vld [vmem:[%s307 + $0x28] sm:$0xff]
        %v392 = vld [vmem:[%s307 + $0x30] sm:$0xff]
        %v393 = vld [vmem:[%s307 + $0x38] sm:$0xff]
        %v394 = vld [vmem:[%s307 + $0x40] sm:$0xff]
        %v395 = vld [vmem:[%s307 + $0x48] sm:$0xff]
        %v396 = vld [vmem:[%s307 + $0x50] sm:$0xff]
        %v397 = vld [vmem:[%s307 + $0x58] sm:$0xff]
        %v398 = vld [vmem:[%s307 + $0x60] sm:$0xff]
        %v399 = vld [vmem:[%s307 + $0x68] sm:$0xff]
        %v400 = vld [vmem:[%s307 + $0x70] sm:$0xff]
        %v401 = vld [vmem:[%s307 + $0x78] sm:$0xff]
        %v402 = vld [vmem:[%s307 + $0x80] sm:$0xff]
        %v403 = vld [vmem:[%s307 + $0x88] sm:$0xff]
        %v404 = vld [vmem:[%s307 + $0x90] sm:$0xff]
        %v405 = vld [vmem:[%s307 + $0x98] sm:$0xff]
        %v406 = vld [vmem:[%s307 + $0xa0] sm:$0xff]
        %v407 = vld [vmem:[%s307 + $0xa8] sm:$0xff]
        %v408 = vld [vmem:[%s307 + $0xb0] sm:$0xff]
        %v409 = vld [vmem:[%s307 + $0xb8] sm:$0xff]
        %v410 = vld [vmem:[%s307 + $0xc0] sm:$0xff]
        %v411 = vld [vmem:[%s307 + $0xc8] sm:$0xff]
        %v412 = vld [vmem:[%s307 + $0xd0] sm:$0xff]
        %v413 = vld [vmem:[%s307 + $0xd8] sm:$0xff]
        %v414 = vld [vmem:[%s307 + $0xe0] sm:$0xff]
        %v415 = vld [vmem:[%s307 + $0xe8] sm:$0xff]
        %v416 = vld [vmem:[%s307 + $0xf0] sm:$0xff]
        %v417 = vld [vmem:[%s307 + $0xf8] sm:$0xff]
        %v418 = vmul.f32 %v354, %v386
        %v419 = vmul.f32 %v355, %v387
        %v420 = vmul.f32 %v356, %v388
        %v421 = vmul.f32 %v357, %v389
        %v422 = vmul.f32 %v358, %v390
        %v423 = vmul.f32 %v359, %v391
        %v424 = vmul.f32 %v360, %v392
        %v425 = vmul.f32 %v361, %v393
        %v426 = vmul.f32 %v362, %v394
        %v427 = vmul.f32 %v363, %v395
        %v428 = vmul.f32 %v364, %v396
        %v429 = vmul.f32 %v365, %v397
        %v430 = vmul.f32 %v366, %v398
        %v431 = vmul.f32 %v367, %v399
        %v432 = vmul.f32 %v368, %v400
        %v433 = vmul.f32 %v369, %v401
        %v434 = vmul.f32 %v370, %v402
        %v435 = vmul.f32 %v371, %v403
        %v436 = vmul.f32 %v372, %v404
        %v437 = vmul.f32 %v373, %v405
        %v438 = vmul.f32 %v374, %v406
        %v439 = vmul.f32 %v375, %v407
        %v440 = vmul.f32 %v376, %v408
        %v441 = vmul.f32 %v377, %v409
        %v442 = vmul.f32 %v378, %v410
        %v443 = vmul.f32 %v379, %v411
        %v444 = vmul.f32 %v380, %v412
        %v445 = vmul.f32 %v381, %v413
        %v446 = vmul.f32 %v382, %v414
        %v447 = vmul.f32 %v383, %v415
        %v448 = vmul.f32 %v384, %v416
        %v449 = vmul.f32 %v385, %v417
        %v450 = vadd.f32 %v418, %v354
        %v451 = vadd.f32 %v419, %v355
        %v452 = vadd.f32 %v420, %v356
        %v453 = vadd.f32 %v421, %v357
        %v454 = vadd.f32 %v422, %v358
        %v455 = vadd.f32 %v423, %v359
        %v456 = vadd.f32 %v424, %v360
        %v457 = vadd.f32 %v425, %v361
        %v458 = vadd.f32 %v426, %v362
        %v459 = vadd.f32 %v427, %v363
        %v460 = vadd.f32 %v428, %v364
        %v461 = vadd.f32 %v429, %v365
        %v462 = vadd.f32 %v430, %v366
        %v463 = vadd.f32 %v431, %v367
        %v464 = vadd.f32 %v432, %v368
        %v465 = vadd.f32 %v433, %v369
        %v466 = vadd.f32 %v434, %v370
        %v467 = vadd.f32 %v435, %v371
        %v468 = vadd.f32 %v436, %v372
        %v469 = vadd.f32 %v437, %v373
        %v470 = vadd.f32 %v438, %v374
        %v471 = vadd.f32 %v439, %v375
        %v472 = vadd.f32 %v440, %v376
        %v473 = vadd.f32 %v441, %v377
        %v474 = vadd.f32 %v442, %v378
        %v475 = vadd.f32 %v443, %v379
        %v476 = vadd.f32 %v444, %v380
        %v477 = vadd.f32 %v445, %v381
        %v478 = vadd.f32 %v446, %v382
        %v479 = vadd.f32 %v447, %v383
        %v480 = vadd.f32 %v448, %v384
        %v481 = vadd.f32 %v449, %v385
        %v482 = vlaneseq
        %v483 = vshrl.u32 %v482, 7
        %v484 = vadd.s32 %v483, 8
        %v485 = vadd.s32 %v483, 16
        %v486 = vadd.s32 %v483, 24
        %v487 = vadd.s32 %v483, 32
        %v488 = vadd.s32 %v483, 40
        %v489 = vadd.s32 %v483, 48
        %v490 = vadd.s32 %v483, 56
        %v491 = vadd.s32 %v483, 64
        %v492 = vadd.s32 %v483, 72
        %v493 = vadd.s32 %v483, 80
        %v494 = vadd.s32 %v483, 88
        %v495 = vadd.s32 %v483, 96
        %v496 = vadd.s32 %v483, 104
        %v497 = vadd.s32 %v483, 112
        %v498 = vadd.s32 %v483, 120
        %v499 = vadd.s32 %v483, 128
        %v500 = vadd.s32 %v483, 136
        %v501 = vadd.s32 %v483, 144
        %v502 = vadd.s32 %v483, 152
        %v503 = vadd.s32 %v483, 160
        %v504 = vadd.s32 %v483, 168
        %v505 = vadd.s32 %v483, 176
        %v506 = vadd.s32 %v483, 184
        %v507 = vadd.s32 %v483, 192
        %v508 = vadd.s32 %v483, 200
        %v509 = vadd.s32 %v483, 208
        %v510 = vadd.s32 %v483, 216
        %v511 = vadd.s32 %v483, 224
        %v512 = vadd.s32 %v483, 232
        %v513 = vadd.s32 %v483, 240
        %v514 = vadd.s32 %v483, 248
        %vm515 = vcmp.lt.s32.totalorder %v483, 0
        %v516 = vsub.s32 0, %v483
        %v517 = vsel %vm515, %v516, %v483
        %v518 = vshrl.u32 %v517, 4
        %v519 = vand.u32 %v517, 15
        %v520 = vsub.s32 0, %v519
        %v521 = vsel %vm515, %v520, %v519
        %vm522 = vcmp.lt.s32.totalorder %v484, 0
        %v523 = vsub.s32 0, %v484
        %v524 = vsel %vm522, %v523, %v484
        %v525 = vshrl.u32 %v524, 4
        %v526 = vand.u32 %v524, 15
        %v527 = vsub.s32 0, %v526
        %v528 = vsel %vm522, %v527, %v526
        %vm529 = vcmp.lt.s32.totalorder %v485, 0
        %v530 = vsub.s32 0, %v485
        %v531 = vsel %vm529, %v530, %v485
        %v532 = vshrl.u32 %v531, 4
        %v533 = vand.u32 %v531, 15
        %v534 = vsub.s32 0, %v533
        %v535 = vsel %vm529, %v534, %v533
        %vm536 = vcmp.lt.s32.totalorder %v486, 0
        %v537 = vsub.s32 0, %v486
        %v538 = vsel %vm536, %v537, %v486
        %v539 = vshrl.u32 %v538, 4
        %v540 = vand.u32 %v538, 15
        %v541 = vsub.s32 0, %v540
        %v542 = vsel %vm536, %v541, %v540
        %vm543 = vcmp.lt.s32.totalorder %v487, 0
        %v544 = vsub.s32 0, %v487
        %v545 = vsel %vm543, %v544, %v487
        %v546 = vshrl.u32 %v545, 4
        %v547 = vand.u32 %v545, 15
        %v548 = vsub.s32 0, %v547
        %v549 = vsel %vm543, %v548, %v547
        %vm550 = vcmp.lt.s32.totalorder %v488, 0
        %v551 = vsub.s32 0, %v488
        %v552 = vsel %vm550, %v551, %v488
        %v553 = vshrl.u32 %v552, 4
        %v554 = vand.u32 %v552, 15
        %v555 = vsub.s32 0, %v554
        %v556 = vsel %vm550, %v555, %v554
        %vm557 = vcmp.lt.s32.totalorder %v489, 0
        %v558 = vsub.s32 0, %v489
        %v559 = vsel %vm557, %v558, %v489
        %v560 = vshrl.u32 %v559, 4
        %v561 = vand.u32 %v559, 15
        %v562 = vsub.s32 0, %v561
        %v563 = vsel %vm557, %v562, %v561
        %vm564 = vcmp.lt.s32.totalorder %v490, 0
        %v565 = vsub.s32 0, %v490
        %v566 = vsel %vm564, %v565, %v490
        %v567 = vshrl.u32 %v566, 4
        %v568 = vand.u32 %v566, 15
        %v569 = vsub.s32 0, %v568
        %v570 = vsel %vm564, %v569, %v568
        %vm571 = vcmp.lt.s32.totalorder %v491, 0
        %v572 = vsub.s32 0, %v491
        %v573 = vsel %vm571, %v572, %v491
        %v574 = vshrl.u32 %v573, 4
        %v575 = vand.u32 %v573, 15
        %v576 = vsub.s32 0, %v575
        %v577 = vsel %vm571, %v576, %v575
        %vm578 = vcmp.lt.s32.totalorder %v492, 0
        %v579 = vsub.s32 0, %v492
        %v580 = vsel %vm578, %v579, %v492
        %v581 = vshrl.u32 %v580, 4
        %v582 = vand.u32 %v580, 15
        %v583 = vsub.s32 0, %v582
        %v584 = vsel %vm578, %v583, %v582
        %vm585 = vcmp.lt.s32.totalorder %v493, 0
        %v586 = vsub.s32 0, %v493
        %v587 = vsel %vm585, %v586, %v493
        %v588 = vshrl.u32 %v587, 4
        %v589 = vand.u32 %v587, 15
        %v590 = vsub.s32 0, %v589
        %v591 = vsel %vm585, %v590, %v589
        %vm592 = vcmp.lt.s32.totalorder %v494, 0
        %v593 = vsub.s32 0, %v494
        %v594 = vsel %vm592, %v593, %v494
        %v595 = vshrl.u32 %v594, 4
        %v596 = vand.u32 %v594, 15
        %v597 = vsub.s32 0, %v596
        %v598 = vsel %vm592, %v597, %v596
        %vm599 = vcmp.lt.s32.totalorder %v495, 0
        %v600 = vsub.s32 0, %v495
        %v601 = vsel %vm599, %v600, %v495
        %v602 = vshrl.u32 %v601, 4
        %v603 = vand.u32 %v601, 15
        %v604 = vsub.s32 0, %v603
        %v605 = vsel %vm599, %v604, %v603
        %vm606 = vcmp.lt.s32.totalorder %v496, 0
        %v607 = vsub.s32 0, %v496
        %v608 = vsel %vm606, %v607, %v496
        %v609 = vshrl.u32 %v608, 4
        %v610 = vand.u32 %v608, 15
        %v611 = vsub.s32 0, %v610
        %v612 = vsel %vm606, %v611, %v610
        %vm613 = vcmp.lt.s32.totalorder %v497, 0
        %v614 = vsub.s32 0, %v497
        %v615 = vsel %vm613, %v614, %v497
        %v616 = vshrl.u32 %v615, 4
        %v617 = vand.u32 %v615, 15
        %v618 = vsub.s32 0, %v617
        %v619 = vsel %vm613, %v618, %v617
        %vm620 = vcmp.lt.s32.totalorder %v498, 0
        %v621 = vsub.s32 0, %v498
        %v622 = vsel %vm620, %v621, %v498
        %v623 = vshrl.u32 %v622, 4
        %v624 = vand.u32 %v622, 15
        %v625 = vsub.s32 0, %v624
        %v626 = vsel %vm620, %v625, %v624
        %vm627 = vcmp.lt.s32.totalorder %v499, 0
        %v628 = vsub.s32 0, %v499
        %v629 = vsel %vm627, %v628, %v499
        %v630 = vshrl.u32 %v629, 4
        %v631 = vand.u32 %v629, 15
        %v632 = vsub.s32 0, %v631
        %v633 = vsel %vm627, %v632, %v631
        %vm634 = vcmp.lt.s32.totalorder %v500, 0
        %v635 = vsub.s32 0, %v500
        %v636 = vsel %vm634, %v635, %v500
        %v637 = vshrl.u32 %v636, 4
        %v638 = vand.u32 %v636, 15
        %v639 = vsub.s32 0, %v638
        %v640 = vsel %vm634, %v639, %v638
        %vm641 = vcmp.lt.s32.totalorder %v501, 0
        %v642 = vsub.s32 0, %v501
        %v643 = vsel %vm641, %v642, %v501
        %v644 = vshrl.u32 %v643, 4
        %v645 = vand.u32 %v643, 15
        %v646 = vsub.s32 0, %v645
        %v647 = vsel %vm641, %v646, %v645
        %vm648 = vcmp.lt.s32.totalorder %v502, 0
        %v649 = vsub.s32 0, %v502
        %v650 = vsel %vm648, %v649, %v502
        %v651 = vshrl.u32 %v650, 4
        %v652 = vand.u32 %v650, 15
        %v653 = vsub.s32 0, %v652
        %v654 = vsel %vm648, %v653, %v652
        %vm655 = vcmp.lt.s32.totalorder %v503, 0
        %v656 = vsub.s32 0, %v503
        %v657 = vsel %vm655, %v656, %v503
        %v658 = vshrl.u32 %v657, 4
        %v659 = vand.u32 %v657, 15
        %v660 = vsub.s32 0, %v659
        %v661 = vsel %vm655, %v660, %v659
        %vm662 = vcmp.lt.s32.totalorder %v504, 0
        %v663 = vsub.s32 0, %v504
        %v664 = vsel %vm662, %v663, %v504
        %v665 = vshrl.u32 %v664, 4
        %v666 = vand.u32 %v664, 15
        %v667 = vsub.s32 0, %v666
        %v668 = vsel %vm662, %v667, %v666
        %vm669 = vcmp.lt.s32.totalorder %v505, 0
        %v670 = vsub.s32 0, %v505
        %v671 = vsel %vm669, %v670, %v505
        %v672 = vshrl.u32 %v671, 4
        %v673 = vand.u32 %v671, 15
        %v674 = vsub.s32 0, %v673
        %v675 = vsel %vm669, %v674, %v673
        %vm676 = vcmp.lt.s32.totalorder %v506, 0
        %v677 = vsub.s32 0, %v506
        %v678 = vsel %vm676, %v677, %v506
        %v679 = vshrl.u32 %v678, 4
        %v680 = vand.u32 %v678, 15
        %v681 = vsub.s32 0, %v680
        %v682 = vsel %vm676, %v681, %v680
        %vm683 = vcmp.lt.s32.totalorder %v507, 0
        %v684 = vsub.s32 0, %v507
        %v685 = vsel %vm683, %v684, %v507
        %v686 = vshrl.u32 %v685, 4
        %v687 = vand.u32 %v685, 15
        %v688 = vsub.s32 0, %v687
        %v689 = vsel %vm683, %v688, %v687
        %vm690 = vcmp.lt.s32.totalorder %v508, 0
        %v691 = vsub.s32 0, %v508
        %v692 = vsel %vm690, %v691, %v508
        %v693 = vshrl.u32 %v692, 4
        %v694 = vand.u32 %v692, 15
        %v695 = vsub.s32 0, %v694
        %v696 = vsel %vm690, %v695, %v694
        %vm697 = vcmp.lt.s32.totalorder %v509, 0
        %v698 = vsub.s32 0, %v509
        %v699 = vsel %vm697, %v698, %v509
        %v700 = vshrl.u32 %v699, 4
        %v701 = vand.u32 %v699, 15
        %v702 = vsub.s32 0, %v701
        %v703 = vsel %vm697, %v702, %v701
        %vm704 = vcmp.lt.s32.totalorder %v510, 0
        %v705 = vsub.s32 0, %v510
        %v706 = vsel %vm704, %v705, %v510
        %v707 = vshrl.u32 %v706, 4
        %v708 = vand.u32 %v706, 15
        %v709 = vsub.s32 0, %v708
        %v710 = vsel %vm704, %v709, %v708
        %vm711 = vcmp.lt.s32.totalorder %v511, 0
        %v712 = vsub.s32 0, %v511
        %v713 = vsel %vm711, %v712, %v511
        %v714 = vshrl.u32 %v713, 4
        %v715 = vand.u32 %v713, 15
        %v716 = vsub.s32 0, %v715
        %v717 = vsel %vm711, %v716, %v715
        %vm718 = vcmp.lt.s32.totalorder %v512, 0
        %v719 = vsub.s32 0, %v512
        %v720 = vsel %vm718, %v719, %v512
        %v721 = vshrl.u32 %v720, 4
        %v722 = vand.u32 %v720, 15
        %v723 = vsub.s32 0, %v722
        %v724 = vsel %vm718, %v723, %v722
        %vm725 = vcmp.lt.s32.totalorder %v513, 0
        %v726 = vsub.s32 0, %v513
        %v727 = vsel %vm725, %v726, %v513
        %v728 = vshrl.u32 %v727, 4
        %v729 = vand.u32 %v727, 15
        %v730 = vsub.s32 0, %v729
        %v731 = vsel %vm725, %v730, %v729
        %vm732 = vcmp.lt.s32.totalorder %v514, 0
        %v733 = vsub.s32 0, %v514
        %v734 = vsel %vm732, %v733, %v514
        %v735 = vshrl.u32 %v734, 4
        %v736 = vand.u32 %v734, 15
        %v737 = vsub.s32 0, %v736
        %v738 = vsel %vm732, %v737, %v736
        %vm739 = vcmp.ne.s32.totalorder %v521, 0
        %vm740 = vcmp.ne.s32.totalorder %v528, 0
        %vm741 = vcmp.ne.s32.totalorder %v535, 0
        %vm742 = vcmp.ne.s32.totalorder %v542, 0
        %vm743 = vcmp.ne.s32.totalorder %v549, 0
        %vm744 = vcmp.ne.s32.totalorder %v556, 0
        %vm745 = vcmp.ne.s32.totalorder %v563, 0
        %vm746 = vcmp.ne.s32.totalorder %v570, 0
        %vm747 = vcmp.ne.s32.totalorder %v577, 0
        %vm748 = vcmp.ne.s32.totalorder %v584, 0
        %vm749 = vcmp.ne.s32.totalorder %v591, 0
        %vm750 = vcmp.ne.s32.totalorder %v598, 0
        %vm751 = vcmp.ne.s32.totalorder %v605, 0
        %vm752 = vcmp.ne.s32.totalorder %v612, 0
        %vm753 = vcmp.ne.s32.totalorder %v619, 0
        %vm754 = vcmp.ne.s32.totalorder %v626, 0
        %vm755 = vcmp.ne.s32.totalorder %v633, 0
        %vm756 = vcmp.ne.s32.totalorder %v640, 0
        %vm757 = vcmp.ne.s32.totalorder %v647, 0
        %vm758 = vcmp.ne.s32.totalorder %v654, 0
        %vm759 = vcmp.ne.s32.totalorder %v661, 0
        %vm760 = vcmp.ne.s32.totalorder %v668, 0
        %vm761 = vcmp.ne.s32.totalorder %v675, 0
        %vm762 = vcmp.ne.s32.totalorder %v682, 0
        %vm763 = vcmp.ne.s32.totalorder %v689, 0
        %vm764 = vcmp.ne.s32.totalorder %v696, 0
        %vm765 = vcmp.ne.s32.totalorder %v703, 0
        %vm766 = vcmp.ne.s32.totalorder %v710, 0
        %vm767 = vcmp.ne.s32.totalorder %v717, 0
        %vm768 = vcmp.ne.s32.totalorder %v724, 0
        %vm769 = vcmp.ne.s32.totalorder %v731, 0
        %vm770 = vcmp.ne.s32.totalorder %v738, 0
        %vm771 = vcmp.lt.s32.totalorder %v521, 0
        %vm772 = vcmp.lt.s32.totalorder %v528, 0
        %vm773 = vcmp.lt.s32.totalorder %v535, 0
        %vm774 = vcmp.lt.s32.totalorder %v542, 0
        %vm775 = vcmp.lt.s32.totalorder %v549, 0
        %vm776 = vcmp.lt.s32.totalorder %v556, 0
        %vm777 = vcmp.lt.s32.totalorder %v563, 0
        %vm778 = vcmp.lt.s32.totalorder %v570, 0
        %vm779 = vcmp.lt.s32.totalorder %v577, 0
        %vm780 = vcmp.lt.s32.totalorder %v584, 0
        %vm781 = vcmp.lt.s32.totalorder %v591, 0
        %vm782 = vcmp.lt.s32.totalorder %v598, 0
        %vm783 = vcmp.lt.s32.totalorder %v605, 0
        %vm784 = vcmp.lt.s32.totalorder %v612, 0
        %vm785 = vcmp.lt.s32.totalorder %v619, 0
        %vm786 = vcmp.lt.s32.totalorder %v626, 0
        %vm787 = vcmp.lt.s32.totalorder %v633, 0
        %vm788 = vcmp.lt.s32.totalorder %v640, 0
        %vm789 = vcmp.lt.s32.totalorder %v647, 0
        %vm790 = vcmp.lt.s32.totalorder %v654, 0
        %vm791 = vcmp.lt.s32.totalorder %v661, 0
        %vm792 = vcmp.lt.s32.totalorder %v668, 0
        %vm793 = vcmp.lt.s32.totalorder %v675, 0
        %vm794 = vcmp.lt.s32.totalorder %v682, 0
        %vm795 = vcmp.lt.s32.totalorder %v689, 0
        %vm796 = vcmp.lt.s32.totalorder %v696, 0
        %vm797 = vcmp.lt.s32.totalorder %v703, 0
        %vm798 = vcmp.lt.s32.totalorder %v710, 0
        %vm799 = vcmp.lt.s32.totalorder %v717, 0
        %vm800 = vcmp.lt.s32.totalorder %v724, 0
        %vm801 = vcmp.lt.s32.totalorder %v731, 0
        %vm802 = vcmp.lt.s32.totalorder %v738, 0
        %vm803 = vmand %vm771, %vm739
        %vm804 = vmand %vm772, %vm740
        %vm805 = vmand %vm773, %vm741
        %vm806 = vmand %vm774, %vm742
        %vm807 = vmand %vm775, %vm743
        %vm808 = vmand %vm776, %vm744
        %vm809 = vmand %vm777, %vm745
        %vm810 = vmand %vm778, %vm746
        %vm811 = vmand %vm779, %vm747
        %vm812 = vmand %vm780, %vm748
        %vm813 = vmand %vm781, %vm749
        %vm814 = vmand %vm782, %vm750
        %vm815 = vmand %vm783, %vm751
        %vm816 = vmand %vm784, %vm752
        %vm817 = vmand %vm785, %vm753
        %vm818 = vmand %vm786, %vm754
        %vm819 = vmand %vm787, %vm755
        %vm820 = vmand %vm788, %vm756
        %vm821 = vmand %vm789, %vm757
        %vm822 = vmand %vm790, %vm758
        %vm823 = vmand %vm791, %vm759
        %vm824 = vmand %vm792, %vm760
        %vm825 = vmand %vm793, %vm761
        %vm826 = vmand %vm794, %vm762
        %vm827 = vmand %vm795, %vm763
        %vm828 = vmand %vm796, %vm764
        %vm829 = vmand %vm797, %vm765
        %vm830 = vmand %vm798, %vm766
        %vm831 = vmand %vm799, %vm767
        %vm832 = vmand %vm800, %vm768
        %vm833 = vmand %vm801, %vm769
        %vm834 = vmand %vm802, %vm770
        %v835 = vadd.s32 %v521, 16
        %v836 = vadd.s32 %v528, 16
        %v837 = vadd.s32 %v535, 16
        %v838 = vadd.s32 %v542, 16
        %v839 = vadd.s32 %v549, 16
        %v840 = vadd.s32 %v556, 16
        %v841 = vadd.s32 %v563, 16
        %v842 = vadd.s32 %v570, 16
        %v843 = vadd.s32 %v577, 16
        %v844 = vadd.s32 %v584, 16
        %v845 = vadd.s32 %v591, 16
        %v846 = vadd.s32 %v598, 16
        %v847 = vadd.s32 %v605, 16
        %v848 = vadd.s32 %v612, 16
        %v849 = vadd.s32 %v619, 16
        %v850 = vadd.s32 %v626, 16
        %v851 = vadd.s32 %v633, 16
        %v852 = vadd.s32 %v640, 16
        %v853 = vadd.s32 %v647, 16
        %v854 = vadd.s32 %v654, 16
        %v855 = vadd.s32 %v661, 16
        %v856 = vadd.s32 %v668, 16
        %v857 = vadd.s32 %v675, 16
        %v858 = vadd.s32 %v682, 16
        %v859 = vadd.s32 %v689, 16
        %v860 = vadd.s32 %v696, 16
        %v861 = vadd.s32 %v703, 16
        %v862 = vadd.s32 %v710, 16
        %v863 = vadd.s32 %v717, 16
        %v864 = vadd.s32 %v724, 16
        %v865 = vadd.s32 %v731, 16
        %v866 = vadd.s32 %v738, 16
        %v867 = vsel %vm803, %v835, %v521
        %v868 = vsel %vm804, %v836, %v528
        %v869 = vsel %vm805, %v837, %v535
        %v870 = vsel %vm806, %v838, %v542
        %v871 = vsel %vm807, %v839, %v549
        %v872 = vsel %vm808, %v840, %v556
        %v873 = vsel %vm809, %v841, %v563
        %v874 = vsel %vm810, %v842, %v570
        %v875 = vsel %vm811, %v843, %v577
        %v876 = vsel %vm812, %v844, %v584
        %v877 = vsel %vm813, %v845, %v591
        %v878 = vsel %vm814, %v846, %v598
        %v879 = vsel %vm815, %v847, %v605
        %v880 = vsel %vm816, %v848, %v612
        %v881 = vsel %vm817, %v849, %v619
        %v882 = vsel %vm818, %v850, %v626
        %v883 = vsel %vm819, %v851, %v633
        %v884 = vsel %vm820, %v852, %v640
        %v885 = vsel %vm821, %v853, %v647
        %v886 = vsel %vm822, %v854, %v654
        %v887 = vsel %vm823, %v855, %v661
        %v888 = vsel %vm824, %v856, %v668
        %v889 = vsel %vm825, %v857, %v675
        %v890 = vsel %vm826, %v858, %v682
        %v891 = vsel %vm827, %v859, %v689
        %v892 = vsel %vm828, %v860, %v696
        %v893 = vsel %vm829, %v861, %v703
        %v894 = vsel %vm830, %v862, %v710
        %v895 = vsel %vm831, %v863, %v717
        %v896 = vsel %vm832, %v864, %v724
        %v897 = vsel %vm833, %v865, %v731
        %v898 = vsel %vm834, %v866, %v738
        %vm899 = vcmp.eq.s32.totalorder %v867, 0
        %vm900 = vcmp.eq.s32.totalorder %v868, 0
        %vm901 = vcmp.eq.s32.totalorder %v869, 0
        %vm902 = vcmp.eq.s32.totalorder %v870, 0
        %vm903 = vcmp.eq.s32.totalorder %v871, 0
        %vm904 = vcmp.eq.s32.totalorder %v872, 0
        %vm905 = vcmp.eq.s32.totalorder %v873, 0
        %vm906 = vcmp.eq.s32.totalorder %v874, 0
        %vm907 = vcmp.eq.s32.totalorder %v875, 0
        %vm908 = vcmp.eq.s32.totalorder %v876, 0
        %vm909 = vcmp.eq.s32.totalorder %v877, 0
        %vm910 = vcmp.eq.s32.totalorder %v878, 0
        %vm911 = vcmp.eq.s32.totalorder %v879, 0
        %vm912 = vcmp.eq.s32.totalorder %v880, 0
        %vm913 = vcmp.eq.s32.totalorder %v881, 0
        %vm914 = vcmp.eq.s32.totalorder %v882, 0
        %vm915 = vcmp.eq.s32.totalorder %v883, 0
        %vm916 = vcmp.eq.s32.totalorder %v884, 0
        %vm917 = vcmp.eq.s32.totalorder %v885, 0
        %vm918 = vcmp.eq.s32.totalorder %v886, 0
        %vm919 = vcmp.eq.s32.totalorder %v887, 0
        %vm920 = vcmp.eq.s32.totalorder %v888, 0
        %vm921 = vcmp.eq.s32.totalorder %v889, 0
        %vm922 = vcmp.eq.s32.totalorder %v890, 0
        %vm923 = vcmp.eq.s32.totalorder %v891, 0
        %vm924 = vcmp.eq.s32.totalorder %v892, 0
        %vm925 = vcmp.eq.s32.totalorder %v893, 0
        %vm926 = vcmp.eq.s32.totalorder %v894, 0
        %vm927 = vcmp.eq.s32.totalorder %v895, 0
        %vm928 = vcmp.eq.s32.totalorder %v896, 0
        %vm929 = vcmp.eq.s32.totalorder %v897, 0
        %vm930 = vcmp.eq.s32.totalorder %v898, 0
        %vm963 = vcmask 1040384
        %v964 = vrot.slane %v450, 7
        %v965 = vrot.slane %v451, 7
        %v966 = vsel %vm963, %v964, %v965
        %v967 = vrot.slane %v452, 7
        %v968 = vsel %vm963, %v965, %v967
        %v969 = vrot.slane %v453, 7
        %v970 = vsel %vm963, %v967, %v969
        %v971 = vrot.slane %v454, 7
        %v972 = vsel %vm963, %v969, %v971
        %v973 = vrot.slane %v455, 7
        %v974 = vsel %vm963, %v971, %v973
        %v975 = vrot.slane %v456, 7
        %v976 = vsel %vm963, %v973, %v975
        %v977 = vrot.slane %v457, 7
        %v978 = vsel %vm963, %v975, %v977
        %v979 = vrot.slane %v458, 7
        %v980 = vsel %vm963, %v977, %v979
        %v981 = vrot.slane %v459, 7
        %v982 = vsel %vm963, %v979, %v981
        %v983 = vrot.slane %v460, 7
        %v984 = vsel %vm963, %v981, %v983
        %v985 = vrot.slane %v461, 7
        %v986 = vsel %vm963, %v983, %v985
        %v987 = vrot.slane %v462, 7
        %v988 = vsel %vm963, %v985, %v987
        %v989 = vrot.slane %v463, 7
        %v990 = vsel %vm963, %v987, %v989
        %v991 = vrot.slane %v464, 7
        %v992 = vsel %vm963, %v989, %v991
        %v993 = vrot.slane %v465, 7
        %v994 = vsel %vm963, %v991, %v993
        %v995 = vrot.slane %v466, 7
        %v996 = vsel %vm963, %v993, %v995
        %v997 = vrot.slane %v467, 7
        %v998 = vsel %vm963, %v995, %v997
        %v999 = vrot.slane %v468, 7
        %v1000 = vsel %vm963, %v997, %v999
        %v1001 = vrot.slane %v469, 7
        %v1002 = vsel %vm963, %v999, %v1001
        %v1003 = vrot.slane %v470, 7
        %v1004 = vsel %vm963, %v1001, %v1003
        %v1005 = vrot.slane %v471, 7
        %v1006 = vsel %vm963, %v1003, %v1005
        %v1007 = vrot.slane %v472, 7
        %v1008 = vsel %vm963, %v1005, %v1007
        %v1009 = vrot.slane %v473, 7
        %v1010 = vsel %vm963, %v1007, %v1009
        %v1011 = vrot.slane %v474, 7
        %v1012 = vsel %vm963, %v1009, %v1011
        %v1013 = vrot.slane %v475, 7
        %v1014 = vsel %vm963, %v1011, %v1013
        %v1015 = vrot.slane %v476, 7
        %v1016 = vsel %vm963, %v1013, %v1015
        %v1017 = vrot.slane %v477, 7
        %v1018 = vsel %vm963, %v1015, %v1017
        %v1019 = vrot.slane %v478, 7
        %v1020 = vsel %vm963, %v1017, %v1019
        %v1021 = vrot.slane %v479, 7
        %v1022 = vsel %vm963, %v1019, %v1021
        %v1023 = vrot.slane %v480, 7
        %v1024 = vsel %vm963, %v1021, %v1023
        %v1025 = vrot.slane %v481, 7
        %v1026 = vsel %vm963, %v1023, %v1025
        %v1059 = vsel %vm963, 0.0, %v964
        %v1060 = vsel %vm899, 0.0, %v1059
        %v1061 = vsel %vm900, 0.0, %v966
        %v1062 = vsel %vm901, 0.0, %v968
        %v1063 = vsel %vm902, 0.0, %v970
        %v1064 = vsel %vm903, 0.0, %v972
        %v1065 = vsel %vm904, 0.0, %v974
        %v1066 = vsel %vm905, 0.0, %v976
        %v1067 = vsel %vm906, 0.0, %v978
        %v1068 = vsel %vm907, 0.0, %v980
        %v1069 = vsel %vm908, 0.0, %v982
        %v1070 = vsel %vm909, 0.0, %v984
        %v1071 = vsel %vm910, 0.0, %v986
        %v1072 = vsel %vm911, 0.0, %v988
        %v1073 = vsel %vm912, 0.0, %v990
        %v1074 = vsel %vm913, 0.0, %v992
        %v1075 = vsel %vm914, 0.0, %v994
        %v1076 = vsel %vm915, 0.0, %v996
        %v1077 = vsel %vm916, 0.0, %v998
        %v1078 = vsel %vm917, 0.0, %v1000
        %v1079 = vsel %vm918, 0.0, %v1002
        %v1080 = vsel %vm919, 0.0, %v1004
        %v1081 = vsel %vm920, 0.0, %v1006
        %v1082 = vsel %vm921, 0.0, %v1008
        %v1083 = vsel %vm922, 0.0, %v1010
        %v1084 = vsel %vm923, 0.0, %v1012
        %v1085 = vsel %vm924, 0.0, %v1014
        %v1086 = vsel %vm925, 0.0, %v1016
        %v1087 = vsel %vm926, 0.0, %v1018
        %v1088 = vsel %vm927, 0.0, %v1020
        %v1089 = vsel %vm928, 0.0, %v1022
        %v1090 = vsel %vm929, 0.0, %v1024
        %v1091 = vsel %vm930, 0.0, %v1026
        %vm1092 = vcmp.eq.s32.totalorder %v867, 15
        %vm1093 = vcmp.eq.s32.totalorder %v868, 15
        %vm1094 = vcmp.eq.s32.totalorder %v869, 15
        %vm1095 = vcmp.eq.s32.totalorder %v870, 15
        %vm1096 = vcmp.eq.s32.totalorder %v871, 15
        %vm1097 = vcmp.eq.s32.totalorder %v872, 15
        %vm1098 = vcmp.eq.s32.totalorder %v873, 15
        %vm1099 = vcmp.eq.s32.totalorder %v874, 15
        %vm1100 = vcmp.eq.s32.totalorder %v875, 15
        %vm1101 = vcmp.eq.s32.totalorder %v876, 15
        %vm1102 = vcmp.eq.s32.totalorder %v877, 15
        %vm1103 = vcmp.eq.s32.totalorder %v878, 15
        %vm1104 = vcmp.eq.s32.totalorder %v879, 15
        %vm1105 = vcmp.eq.s32.totalorder %v880, 15
        %vm1106 = vcmp.eq.s32.totalorder %v881, 15
        %vm1107 = vcmp.eq.s32.totalorder %v882, 15
        %vm1108 = vcmp.eq.s32.totalorder %v883, 15
        %vm1109 = vcmp.eq.s32.totalorder %v884, 15
        %vm1110 = vcmp.eq.s32.totalorder %v885, 15
        %vm1111 = vcmp.eq.s32.totalorder %v886, 15
        %vm1112 = vcmp.eq.s32.totalorder %v887, 15
        %vm1113 = vcmp.eq.s32.totalorder %v888, 15
        %vm1114 = vcmp.eq.s32.totalorder %v889, 15
        %vm1115 = vcmp.eq.s32.totalorder %v890, 15
        %vm1116 = vcmp.eq.s32.totalorder %v891, 15
        %vm1117 = vcmp.eq.s32.totalorder %v892, 15
        %vm1118 = vcmp.eq.s32.totalorder %v893, 15
        %vm1119 = vcmp.eq.s32.totalorder %v894, 15
        %vm1120 = vcmp.eq.s32.totalorder %v895, 15
        %vm1121 = vcmp.eq.s32.totalorder %v896, 15
        %vm1122 = vcmp.eq.s32.totalorder %v897, 15
        %vm1123 = vcmp.eq.s32.totalorder %v898, 15
        %vm1124 = vcmask 1046528
        %v1125 = vrot.slane %v450, 1
        %v1126 = vrot.slane %v451, 1
        %v1127 = vsel %vm1124, %v1125, %v1126
        %v1128 = vrot.slane %v452, 1
        %v1129 = vsel %vm1124, %v1126, %v1128
        %v1130 = vrot.slane %v453, 1
        %v1131 = vsel %vm1124, %v1128, %v1130
        %v1132 = vrot.slane %v454, 1
        %v1133 = vsel %vm1124, %v1130, %v1132
        %v1134 = vrot.slane %v455, 1
        %v1135 = vsel %vm1124, %v1132, %v1134
        %v1136 = vrot.slane %v456, 1
        %v1137 = vsel %vm1124, %v1134, %v1136
        %v1138 = vrot.slane %v457, 1
        %v1139 = vsel %vm1124, %v1136, %v1138
        %v1140 = vrot.slane %v458, 1
        %v1141 = vsel %vm1124, %v1138, %v1140
        %v1142 = vrot.slane %v459, 1
        %v1143 = vsel %vm1124, %v1140, %v1142
        %v1144 = vrot.slane %v460, 1
        %v1145 = vsel %vm1124, %v1142, %v1144
        %v1146 = vrot.slane %v461, 1
        %v1147 = vsel %vm1124, %v1144, %v1146
        %v1148 = vrot.slane %v462, 1
        %v1149 = vsel %vm1124, %v1146, %v1148
        %v1150 = vrot.slane %v463, 1
        %v1151 = vsel %vm1124, %v1148, %v1150
        %v1152 = vrot.slane %v464, 1
        %v1153 = vsel %vm1124, %v1150, %v1152
        %v1154 = vrot.slane %v465, 1
        %v1155 = vsel %vm1124, %v1152, %v1154
        %v1156 = vrot.slane %v466, 1
        %v1157 = vsel %vm1124, %v1154, %v1156
        %v1158 = vrot.slane %v467, 1
        %v1159 = vsel %vm1124, %v1156, %v1158
        %v1160 = vrot.slane %v468, 1
        %v1161 = vsel %vm1124, %v1158, %v1160
        %v1162 = vrot.slane %v469, 1
        %v1163 = vsel %vm1124, %v1160, %v1162
        %v1164 = vrot.slane %v470, 1
        %v1165 = vsel %vm1124, %v1162, %v1164
        %v1166 = vrot.slane %v471, 1
        %v1167 = vsel %vm1124, %v1164, %v1166
        %v1168 = vrot.slane %v472, 1
        %v1169 = vsel %vm1124, %v1166, %v1168
        %v1170 = vrot.slane %v473, 1
        %v1171 = vsel %vm1124, %v1168, %v1170
        %v1172 = vrot.slane %v474, 1
        %v1173 = vsel %vm1124, %v1170, %v1172
        %v1174 = vrot.slane %v475, 1
        %v1175 = vsel %vm1124, %v1172, %v1174
        %v1176 = vrot.slane %v476, 1
        %v1177 = vsel %vm1124, %v1174, %v1176
        %v1178 = vrot.slane %v477, 1
        %v1179 = vsel %vm1124, %v1176, %v1178
        %v1180 = vrot.slane %v478, 1
        %v1181 = vsel %vm1124, %v1178, %v1180
        %v1182 = vrot.slane %v479, 1
        %v1183 = vsel %vm1124, %v1180, %v1182
        %v1184 = vrot.slane %v480, 1
        %v1185 = vsel %vm1124, %v1182, %v1184
        %v1186 = vrot.slane %v481, 1
        %v1187 = vsel %vm1124, %v1184, %v1186
        %v1220 = vsel %vm1124, %v1186, 0.0
        %v1221 = vsel %vm1092, 0.0, %v1127
        %v1222 = vsel %vm1093, 0.0, %v1129
        %v1223 = vsel %vm1094, 0.0, %v1131
        %v1224 = vsel %vm1095, 0.0, %v1133
        %v1225 = vsel %vm1096, 0.0, %v1135
        %v1226 = vsel %vm1097, 0.0, %v1137
        %v1227 = vsel %vm1098, 0.0, %v1139
        %v1228 = vsel %vm1099, 0.0, %v1141
        %v1229 = vsel %vm1100, 0.0, %v1143
        %v1230 = vsel %vm1101, 0.0, %v1145
        %v1231 = vsel %vm1102, 0.0, %v1147
        %v1232 = vsel %vm1103, 0.0, %v1149
        %v1233 = vsel %vm1104, 0.0, %v1151
        %v1234 = vsel %vm1105, 0.0, %v1153
        %v1235 = vsel %vm1106, 0.0, %v1155
        %v1236 = vsel %vm1107, 0.0, %v1157
        %v1237 = vsel %vm1108, 0.0, %v1159
        %v1238 = vsel %vm1109, 0.0, %v1161
        %v1239 = vsel %vm1110, 0.0, %v1163
        %v1240 = vsel %vm1111, 0.0, %v1165
        %v1241 = vsel %vm1112, 0.0, %v1167
        %v1242 = vsel %vm1113, 0.0, %v1169
        %v1243 = vsel %vm1114, 0.0, %v1171
        %v1244 = vsel %vm1115, 0.0, %v1173
        %v1245 = vsel %vm1116, 0.0, %v1175
        %v1246 = vsel %vm1117, 0.0, %v1177
        %v1247 = vsel %vm1118, 0.0, %v1179
        %v1248 = vsel %vm1119, 0.0, %v1181
        %v1249 = vsel %vm1120, 0.0, %v1183
        %v1250 = vsel %vm1121, 0.0, %v1185
        %v1251 = vsel %vm1122, 0.0, %v1187
        %v1252 = vsel %vm1123, 0.0, %v1220
        %vm1253 = vcmask 261120
        %1254 = vst.msk [vmem:[#allocation2] sm:$0xff] %vm1253, 0
        %1255 = vst.msk [vmem:[#allocation2 + $0x88] sm:$0xff] %vm1253, 0
        %v1256 = vpack.c.bf16 %v1061, %v1060
        %v1257 = vpack.c.bf16 %v1063, %v1062
        %v1258 = vpack.c.bf16 %v1065, %v1064
        %v1259 = vpack.c.bf16 %v1067, %v1066
        %v1260 = vpack.c.bf16 %v1069, %v1068
        %v1261 = vpack.c.bf16 %v1071, %v1070
        %v1262 = vpack.c.bf16 %v1073, %v1072
        %v1263 = vpack.c.bf16 %v1075, %v1074
        %v1264 = vpack.c.bf16 %v1077, %v1076
        %v1265 = vpack.c.bf16 %v1079, %v1078
        %v1266 = vpack.c.bf16 %v1081, %v1080
        %v1267 = vpack.c.bf16 %v1083, %v1082
        %v1268 = vpack.c.bf16 %v1085, %v1084
        %v1269 = vpack.c.bf16 %v1087, %v1086
        %v1270 = vpack.c.bf16 %v1089, %v1088
        %v1271 = vpack.c.bf16 %v1091, %v1090
        %1272 = vst.msk [vmem:[#allocation2 + $0x8] sm:$0xff] %vm1253, %v1256
        %1273 = vst.msk [vmem:[#allocation2 + $0x10] sm:$0xff] %vm1253, %v1257
        %1274 = vst.msk [vmem:[#allocation2 + $0x18] sm:$0xff] %vm1253, %v1258
        %1275 = vst.msk [vmem:[#allocation2 + $0x20] sm:$0xff] %vm1253, %v1259
        %1276 = vst.msk [vmem:[#allocation2 + $0x28] sm:$0xff] %vm1253, %v1260
        %1277 = vst.msk [vmem:[#allocation2 + $0x30] sm:$0xff] %vm1253, %v1261
        %1278 = vst.msk [vmem:[#allocation2 + $0x38] sm:$0xff] %vm1253, %v1262
        %1279 = vst.msk [vmem:[#allocation2 + $0x40] sm:$0xff] %vm1253, %v1263
        %1280 = vst.msk [vmem:[#allocation2 + $0x48] sm:$0xff] %vm1253, %v1264
        %1281 = vst.msk [vmem:[#allocation2 + $0x50] sm:$0xff] %vm1253, %v1265
        %1282 = vst.msk [vmem:[#allocation2 + $0x58] sm:$0xff] %vm1253, %v1266
        %1283 = vst.msk [vmem:[#allocation2 + $0x60] sm:$0xff] %vm1253, %v1267
        %1284 = vst.msk [vmem:[#allocation2 + $0x68] sm:$0xff] %vm1253, %v1268
        %1285 = vst.msk [vmem:[#allocation2 + $0x70] sm:$0xff] %vm1253, %v1269
        %1286 = vst.msk [vmem:[#allocation2 + $0x78] sm:$0xff] %vm1253, %v1270
        %1287 = vst.msk [vmem:[#allocation2 + $0x80] sm:$0xff] %vm1253, %v1271
        %1288 = vst.msk [vmem:[#allocation3] sm:$0xff] %vm1253, 0
        %1289 = vst.msk [vmem:[#allocation3 + $0x88] sm:$0xff] %vm1253, 0
        %v1290 = vpack.c.bf16 %v451, %v450
        %v1291 = vpack.c.bf16 %v453, %v452
        %v1292 = vpack.c.bf16 %v455, %v454
        %v1293 = vpack.c.bf16 %v457, %v456
        %v1294 = vpack.c.bf16 %v459, %v458
        %v1295 = vpack.c.bf16 %v461, %v460
        %v1296 = vpack.c.bf16 %v463, %v462
        %v1297 = vpack.c.bf16 %v465, %v464
        %v1298 = vpack.c.bf16 %v467, %v466
        %v1299 = vpack.c.bf16 %v469, %v468
        %v1300 = vpack.c.bf16 %v471, %v470
        %v1301 = vpack.c.bf16 %v473, %v472
        %v1302 = vpack.c.bf16 %v475, %v474
        %v1303 = vpack.c.bf16 %v477, %v476
        %v1304 = vpack.c.bf16 %v479, %v478
        %v1305 = vpack.c.bf16 %v481, %v480
        %1306 = vst.msk [vmem:[#allocation3 + $0x8] sm:$0xff] %vm1253, %v1290
        %1307 = vst.msk [vmem:[#allocation3 + $0x10] sm:$0xff] %vm1253, %v1291
        %1308 = vst.msk [vmem:[#allocation3 + $0x18] sm:$0xff] %vm1253, %v1292
        %1309 = vst.msk [vmem:[#allocation3 + $0x20] sm:$0xff] %vm1253, %v1293
        %1310 = vst.msk [vmem:[#allocation3 + $0x28] sm:$0xff] %vm1253, %v1294
        %1311 = vst.msk [vmem:[#allocation3 + $0x30] sm:$0xff] %vm1253, %v1295
        %1312 = vst.msk [vmem:[#allocation3 + $0x38] sm:$0xff] %vm1253, %v1296
        %1313 = vst.msk [vmem:[#allocation3 + $0x40] sm:$0xff] %vm1253, %v1297
        %1314 = vst.msk [vmem:[#allocation3 + $0x48] sm:$0xff] %vm1253, %v1298
        %1315 = vst.msk [vmem:[#allocation3 + $0x50] sm:$0xff] %vm1253, %v1299
        %1316 = vst.msk [vmem:[#allocation3 + $0x58] sm:$0xff] %vm1253, %v1300
        %1317 = vst.msk [vmem:[#allocation3 + $0x60] sm:$0xff] %vm1253, %v1301
        %1318 = vst.msk [vmem:[#allocation3 + $0x68] sm:$0xff] %vm1253, %v1302
        %1319 = vst.msk [vmem:[#allocation3 + $0x70] sm:$0xff] %vm1253, %v1303
        %1320 = vst.msk [vmem:[#allocation3 + $0x78] sm:$0xff] %vm1253, %v1304
        %1321 = vst.msk [vmem:[#allocation3 + $0x80] sm:$0xff] %vm1253, %v1305
        %1322 = vst.msk [vmem:[#allocation4] sm:$0xff] %vm1253, 0
        %1323 = vst.msk [vmem:[#allocation4 + $0x88] sm:$0xff] %vm1253, 0
        %v1324 = vpack.c.bf16 %v1222, %v1221
        %v1325 = vpack.c.bf16 %v1224, %v1223
        %v1326 = vpack.c.bf16 %v1226, %v1225
        %v1327 = vpack.c.bf16 %v1228, %v1227
        %v1328 = vpack.c.bf16 %v1230, %v1229
        %v1329 = vpack.c.bf16 %v1232, %v1231
        %v1330 = vpack.c.bf16 %v1234, %v1233
        %v1331 = vpack.c.bf16 %v1236, %v1235
        %v1332 = vpack.c.bf16 %v1238, %v1237
        %v1333 = vpack.c.bf16 %v1240, %v1239
        %v1334 = vpack.c.bf16 %v1242, %v1241
        %v1335 = vpack.c.bf16 %v1244, %v1243
        %v1336 = vpack.c.bf16 %v1246, %v1245
        %v1337 = vpack.c.bf16 %v1248, %v1247
        %v1338 = vpack.c.bf16 %v1250, %v1249
        %v1339 = vpack.c.bf16 %v1252, %v1251
        %1340 = vst.msk [vmem:[#allocation4 + $0x8] sm:$0xff] %vm1253, %v1324
        %1341 = vst.msk [vmem:[#allocation4 + $0x10] sm:$0xff] %vm1253, %v1325
        %1342 = vst.msk [vmem:[#allocation4 + $0x18] sm:$0xff] %vm1253, %v1326
        %1343 = vst.msk [vmem:[#allocation4 + $0x20] sm:$0xff] %vm1253, %v1327
        %1344 = vst.msk [vmem:[#allocation4 + $0x28] sm:$0xff] %vm1253, %v1328
        %1345 = vst.msk [vmem:[#allocation4 + $0x30] sm:$0xff] %vm1253, %v1329
        %1346 = vst.msk [vmem:[#allocation4 + $0x38] sm:$0xff] %vm1253, %v1330
        %1347 = vst.msk [vmem:[#allocation4 + $0x40] sm:$0xff] %vm1253, %v1331
        %1348 = vst.msk [vmem:[#allocation4 + $0x48] sm:$0xff] %vm1253, %v1332
        %1349 = vst.msk [vmem:[#allocation4 + $0x50] sm:$0xff] %vm1253, %v1333
        %1350 = vst.msk [vmem:[#allocation4 + $0x58] sm:$0xff] %vm1253, %v1334
        %1351 = vst.msk [vmem:[#allocation4 + $0x60] sm:$0xff] %vm1253, %v1335
        %1352 = vst.msk [vmem:[#allocation4 + $0x68] sm:$0xff] %vm1253, %v1336
        %1353 = vst.msk [vmem:[#allocation4 + $0x70] sm:$0xff] %vm1253, %v1337
        %1354 = vst.msk [vmem:[#allocation4 + $0x78] sm:$0xff] %vm1253, %v1338
        %1355 = vst.msk [vmem:[#allocation4 + $0x80] sm:$0xff] %vm1253, %v1339
        %v1356 = vld [vmem:[#allocation2] sm:$0xff]
        %v1357 = vld [vmem:[#allocation2 + $0x8] sm:$0xff]
        %v1358 = vld [vmem:[#allocation2 + $0x10] sm:$0xff]
        %v1359 = vld [vmem:[#allocation2 + $0x18] sm:$0xff]
        %v1360 = vld [vmem:[#allocation2 + $0x20] sm:$0xff]
        %v1361 = vld [vmem:[#allocation2 + $0x28] sm:$0xff]
        %v1362 = vld [vmem:[#allocation2 + $0x30] sm:$0xff]
        %v1363 = vld [vmem:[#allocation2 + $0x38] sm:$0xff]
        %v1364 = vld [vmem:[#allocation2 + $0x40] sm:$0xff]
        %v1365 = vld [vmem:[#allocation2 + $0x48] sm:$0xff]
        %v1366 = vld [vmem:[#allocation2 + $0x50] sm:$0xff]
        %v1367 = vld [vmem:[#allocation2 + $0x58] sm:$0xff]
        %v1368 = vld [vmem:[#allocation2 + $0x60] sm:$0xff]
        %v1369 = vld [vmem:[#allocation2 + $0x68] sm:$0xff]
        %v1370 = vld [vmem:[#allocation2 + $0x70] sm:$0xff]
        %v1371 = vld [vmem:[#allocation2 + $0x78] sm:$0xff]
        %v1372 = vld [vmem:[#allocation3] sm:$0xff]
        %v1373 = vld [vmem:[#allocation3 + $0x8] sm:$0xff]
        %v1374 = vld [vmem:[#allocation3 + $0x10] sm:$0xff]
        %v1375 = vld [vmem:[#allocation3 + $0x18] sm:$0xff]
        %v1376 = vld [vmem:[#allocation3 + $0x20] sm:$0xff]
        %v1377 = vld [vmem:[#allocation3 + $0x28] sm:$0xff]
        %v1378 = vld [vmem:[#allocation3 + $0x30] sm:$0xff]
        %v1379 = vld [vmem:[#allocation3 + $0x38] sm:$0xff]
        %v1380 = vld [vmem:[#allocation3 + $0x40] sm:$0xff]
        %v1381 = vld [vmem:[#allocation3 + $0x48] sm:$0xff]
        %v1382 = vld [vmem:[#allocation3 + $0x50] sm:$0xff]
        %v1383 = vld [vmem:[#allocation3 + $0x58] sm:$0xff]
        %v1384 = vld [vmem:[#allocation3 + $0x60] sm:$0xff]
        %v1385 = vld [vmem:[#allocation3 + $0x68] sm:$0xff]
        %v1386 = vld [vmem:[#allocation3 + $0x70] sm:$0xff]
        %v1387 = vld [vmem:[#allocation3 + $0x78] sm:$0xff]
        %v1388 = vld [vmem:[#allocation4] sm:$0xff]
        %v1389 = vld [vmem:[#allocation4 + $0x8] sm:$0xff]
        %v1390 = vld [vmem:[#allocation4 + $0x10] sm:$0xff]
        %v1391 = vld [vmem:[#allocation4 + $0x18] sm:$0xff]
        %v1392 = vld [vmem:[#allocation4 + $0x20] sm:$0xff]
        %v1393 = vld [vmem:[#allocation4 + $0x28] sm:$0xff]
        %v1394 = vld [vmem:[#allocation4 + $0x30] sm:$0xff]
        %v1395 = vld [vmem:[#allocation4 + $0x38] sm:$0xff]
        %v1396 = vld [vmem:[#allocation4 + $0x40] sm:$0xff]
        %v1397 = vld [vmem:[#allocation4 + $0x48] sm:$0xff]
        %v1398 = vld [vmem:[#allocation4 + $0x50] sm:$0xff]
        %v1399 = vld [vmem:[#allocation4 + $0x58] sm:$0xff]
        %v1400 = vld [vmem:[#allocation4 + $0x60] sm:$0xff]
        %v1401 = vld [vmem:[#allocation4 + $0x68] sm:$0xff]
        %v1402 = vld [vmem:[#allocation4 + $0x70] sm:$0xff]
        %v1403 = vld [vmem:[#allocation4 + $0x78] sm:$0xff]
        %v1404 = vld [vmem:[#allocation2 + $0x80] sm:$0xff]
        %1421 = vrot.lane.b32.xlu0 %v1372, 32
        %v1422 = vpop.permute.xlu0 %1421
        %1423 = vrot.lane.b32.xlu0 %v1373, 32
        %v1424 = vpop.permute.xlu0 %1423
        %1425 = vrot.lane.b32.xlu0 %v1374, 32
        %v1426 = vpop.permute.xlu0 %1425
        %1427 = vrot.lane.b32.xlu0 %v1375, 32
        %v1428 = vpop.permute.xlu0 %1427
        %1429 = vrot.lane.b32.xlu0 %v1376, 32
        %v1430 = vpop.permute.xlu0 %1429
        %1431 = vrot.lane.b32.xlu0 %v1377, 32
        %v1432 = vpop.permute.xlu0 %1431
        %1433 = vrot.lane.b32.xlu0 %v1378, 32
        %v1434 = vpop.permute.xlu0 %1433
        %1435 = vrot.lane.b32.xlu0 %v1379, 32
        %v1436 = vpop.permute.xlu0 %1435
        %1437 = vrot.lane.b32.xlu0 %v1380, 32
        %v1438 = vpop.permute.xlu0 %1437
        %1439 = vrot.lane.b32.xlu0 %v1381, 32
        %v1440 = vpop.permute.xlu0 %1439
        %1441 = vrot.lane.b32.xlu0 %v1382, 32
        %v1442 = vpop.permute.xlu0 %1441
        %1443 = vrot.lane.b32.xlu0 %v1383, 32
        %v1444 = vpop.permute.xlu0 %1443
        %1445 = vrot.lane.b32.xlu0 %v1384, 32
        %v1446 = vpop.permute.xlu0 %1445
        %1447 = vrot.lane.b32.xlu0 %v1385, 32
        %v1448 = vpop.permute.xlu0 %1447
        %1449 = vrot.lane.b32.xlu0 %v1386, 32
        %v1450 = vpop.permute.xlu0 %1449
        %1451 = vrot.lane.b32.xlu0 %v1387, 32
        %v1452 = vpop.permute.xlu0 %1451
        %1469 = vrot.lane.b32.xlu0 %v1388, 64
        %v1470 = vpop.permute.xlu0 %1469
        %1471 = vrot.lane.b32.xlu0 %v1389, 64
        %v1472 = vpop.permute.xlu0 %1471
        %1473 = vrot.lane.b32.xlu0 %v1390, 64
        %v1474 = vpop.permute.xlu0 %1473
        %1475 = vrot.lane.b32.xlu0 %v1391, 64
        %v1476 = vpop.permute.xlu0 %1475
        %1477 = vrot.lane.b32.xlu0 %v1392, 64
        %v1478 = vpop.permute.xlu0 %1477
        %1479 = vrot.lane.b32.xlu0 %v1393, 64
        %v1480 = vpop.permute.xlu0 %1479
        %1481 = vrot.lane.b32.xlu0 %v1394, 64
        %v1482 = vpop.permute.xlu0 %1481
        %1483 = vrot.lane.b32.xlu0 %v1395, 64
        %v1484 = vpop.permute.xlu0 %1483
        %1485 = vrot.lane.b32.xlu0 %v1396, 64
        %v1486 = vpop.permute.xlu0 %1485
        %1487 = vrot.lane.b32.xlu0 %v1397, 64
        %v1488 = vpop.permute.xlu0 %1487
        %1489 = vrot.lane.b32.xlu0 %v1398, 64
        %v1490 = vpop.permute.xlu0 %1489
        %1491 = vrot.lane.b32.xlu0 %v1399, 64
        %v1492 = vpop.permute.xlu0 %1491
        %1493 = vrot.lane.b32.xlu0 %v1400, 64
        %v1494 = vpop.permute.xlu0 %1493
        %1495 = vrot.lane.b32.xlu0 %v1401, 64
        %v1496 = vpop.permute.xlu0 %1495
        %1497 = vrot.lane.b32.xlu0 %v1402, 64
        %v1498 = vpop.permute.xlu0 %1497
        %1499 = vrot.lane.b32.xlu0 %v1403, 64
        %v1500 = vpop.permute.xlu0 %1499
        %1517 = vrot.lane.b32.xlu0 %v1357, 96
        %v1518 = vpop.permute.xlu0 %1517
        %1519 = vrot.lane.b32.xlu0 %v1358, 96
        %v1520 = vpop.permute.xlu0 %1519
        %1521 = vrot.lane.b32.xlu0 %v1359, 96
        %v1522 = vpop.permute.xlu0 %1521
        %1523 = vrot.lane.b32.xlu0 %v1360, 96
        %v1524 = vpop.permute.xlu0 %1523
        %1525 = vrot.lane.b32.xlu0 %v1361, 96
        %v1526 = vpop.permute.xlu0 %1525
        %1527 = vrot.lane.b32.xlu0 %v1362, 96
        %v1528 = vpop.permute.xlu0 %1527
        %1529 = vrot.lane.b32.xlu0 %v1363, 96
        %v1530 = vpop.permute.xlu0 %1529
        %1531 = vrot.lane.b32.xlu0 %v1364, 96
        %v1532 = vpop.permute.xlu0 %1531
        %1533 = vrot.lane.b32.xlu0 %v1365, 96
        %v1534 = vpop.permute.xlu0 %1533
        %1535 = vrot.lane.b32.xlu0 %v1366, 96
        %v1536 = vpop.permute.xlu0 %1535
        %1537 = vrot.lane.b32.xlu0 %v1367, 96
        %v1538 = vpop.permute.xlu0 %1537
        %1539 = vrot.lane.b32.xlu0 %v1368, 96
        %v1540 = vpop.permute.xlu0 %1539
        %1541 = vrot.lane.b32.xlu0 %v1369, 96
        %v1542 = vpop.permute.xlu0 %1541
        %1543 = vrot.lane.b32.xlu0 %v1370, 96
        %v1544 = vpop.permute.xlu0 %1543
        %1545 = vrot.lane.b32.xlu0 %v1371, 96
        %v1546 = vpop.permute.xlu0 %1545
        %1547 = vrot.lane.b32.xlu0 %v1404, 96
        %v1548 = vpop.permute.xlu0 %1547
        %v1551 = vsel %vm1253, %v1356, %v1422
        %v1554 = vsel %vm1253, %v1357, %v1424
        %v1557 = vsel %vm1253, %v1358, %v1426
        %v1560 = vsel %vm1253, %v1359, %v1428
        %v1563 = vsel %vm1253, %v1360, %v1430
        %v1566 = vsel %vm1253, %v1361, %v1432
        %v1569 = vsel %vm1253, %v1362, %v1434
        %v1572 = vsel %vm1253, %v1363, %v1436
        %v1575 = vsel %vm1253, %v1364, %v1438
        %v1578 = vsel %vm1253, %v1365, %v1440
        %v1581 = vsel %vm1253, %v1366, %v1442
        %v1584 = vsel %vm1253, %v1367, %v1444
        %v1587 = vsel %vm1253, %v1368, %v1446
        %v1590 = vsel %vm1253, %v1369, %v1448
        %v1593 = vsel %vm1253, %v1370, %v1450
        %v1596 = vsel %vm1253, %v1371, %v1452
        %vm1597 = vcmask 523264
        %v1599 = vsel %vm1597, %v1551, %v1470
        %v1601 = vsel %vm1597, %v1554, %v1472
        %v1603 = vsel %vm1597, %v1557, %v1474
        %v1605 = vsel %vm1597, %v1560, %v1476
        %v1607 = vsel %vm1597, %v1563, %v1478
        %v1609 = vsel %vm1597, %v1566, %v1480
        %v1611 = vsel %vm1597, %v1569, %v1482
        %v1613 = vsel %vm1597, %v1572, %v1484
        %v1615 = vsel %vm1597, %v1575, %v1486
        %v1617 = vsel %vm1597, %v1578, %v1488
        %v1619 = vsel %vm1597, %v1581, %v1490
        %v1621 = vsel %vm1597, %v1584, %v1492
        %v1623 = vsel %vm1597, %v1587, %v1494
        %v1625 = vsel %vm1597, %v1590, %v1496
        %v1627 = vsel %vm1597, %v1593, %v1498
        %v1629 = vsel %vm1597, %v1596, %v1500
        %vm1630 = vcmask 785408
        %v1632 = vsel %vm1630, %v1599, %v1518
        %v1635 = vsel %vm1630, %v1601, %v1520
        %v1638 = vsel %vm1630, %v1603, %v1522
        %v1641 = vsel %vm1630, %v1605, %v1524
        %v1644 = vsel %vm1630, %v1607, %v1526
        %v1647 = vsel %vm1630, %v1609, %v1528
        %v1650 = vsel %vm1630, %v1611, %v1530
        %v1653 = vsel %vm1630, %v1613, %v1532
        %v1656 = vsel %vm1630, %v1615, %v1534
        %v1659 = vsel %vm1630, %v1617, %v1536
        %v1662 = vsel %vm1630, %v1619, %v1538
        %v1665 = vsel %vm1630, %v1621, %v1540
        %v1668 = vsel %vm1630, %v1623, %v1542
        %v1671 = vsel %vm1630, %v1625, %v1544
        %v1674 = vsel %vm1630, %v1627, %v1546
        %v1677 = vsel %vm1630, %v1629, %v1548
        %1679 = vst [vmem:[#allocation5] sm:$0xff] %v1632
        %1680 = vst [vmem:[#allocation5 + $0x10] sm:$0xff] %v1635
        %1681 = vst [vmem:[#allocation5 + $0x20] sm:$0xff] %v1638
        %1682 = vst [vmem:[#allocation5 + $0x30] sm:$0xff] %v1641
        %1683 = vst [vmem:[#allocation5 + $0x40] sm:$0xff] %v1644
        %1684 = vst [vmem:[#allocation5 + $0x50] sm:$0xff] %v1647
        %1685 = vst [vmem:[#allocation5 + $0x60] sm:$0xff] %v1650
        %1686 = vst [vmem:[#allocation5 + $0x70] sm:$0xff] %v1653
        %1687 = vst [vmem:[#allocation5 + $0x80] sm:$0xff] %v1656
        %1688 = vst [vmem:[#allocation5 + $0x90] sm:$0xff] %v1659
        %1689 = vst [vmem:[#allocation5 + $0xa0] sm:$0xff] %v1662
        %1690 = vst [vmem:[#allocation5 + $0xb0] sm:$0xff] %v1665
        %1691 = vst [vmem:[#allocation5 + $0xc0] sm:$0xff] %v1668
        %1692 = vst [vmem:[#allocation5 + $0xd0] sm:$0xff] %v1671
        %1693 = vst [vmem:[#allocation5 + $0xe0] sm:$0xff] %v1674
        %1694 = vst [vmem:[#allocation5 + $0xf0] sm:$0xff] %v1677
        %v1695 = vld [vmem:[#allocation3 + $0x8] sm:$0xff]
        %v1696 = vld [vmem:[#allocation3 + $0x10] sm:$0xff]
        %v1697 = vld [vmem:[#allocation3 + $0x18] sm:$0xff]
        %v1698 = vld [vmem:[#allocation3 + $0x20] sm:$0xff]
        %v1699 = vld [vmem:[#allocation3 + $0x28] sm:$0xff]
        %v1700 = vld [vmem:[#allocation3 + $0x30] sm:$0xff]
        %v1701 = vld [vmem:[#allocation3 + $0x38] sm:$0xff]
        %v1702 = vld [vmem:[#allocation3 + $0x40] sm:$0xff]
        %v1703 = vld [vmem:[#allocation3 + $0x48] sm:$0xff]
        %v1704 = vld [vmem:[#allocation3 + $0x50] sm:$0xff]
        %v1705 = vld [vmem:[#allocation3 + $0x58] sm:$0xff]
        %v1706 = vld [vmem:[#allocation3 + $0x60] sm:$0xff]
        %v1707 = vld [vmem:[#allocation3 + $0x68] sm:$0xff]
        %v1708 = vld [vmem:[#allocation3 + $0x70] sm:$0xff]
        %v1709 = vld [vmem:[#allocation3 + $0x78] sm:$0xff]
        %v1710 = vld [vmem:[#allocation3 + $0x80] sm:$0xff]
        %v1711 = vld [vmem:[#allocation4 + $0x8] sm:$0xff]
        %v1712 = vld [vmem:[#allocation4 + $0x10] sm:$0xff]
        %v1713 = vld [vmem:[#allocation4 + $0x18] sm:$0xff]
        %v1714 = vld [vmem:[#allocation4 + $0x20] sm:$0xff]
        %v1715 = vld [vmem:[#allocation4 + $0x28] sm:$0xff]
        %v1716 = vld [vmem:[#allocation4 + $0x30] sm:$0xff]
        %v1717 = vld [vmem:[#allocation4 + $0x38] sm:$0xff]
        %v1718 = vld [vmem:[#allocation4 + $0x40] sm:$0xff]
        %v1719 = vld [vmem:[#allocation4 + $0x48] sm:$0xff]
        %v1720 = vld [vmem:[#allocation4 + $0x50] sm:$0xff]
        %v1721 = vld [vmem:[#allocation4 + $0x58] sm:$0xff]
        %v1722 = vld [vmem:[#allocation4 + $0x60] sm:$0xff]
        %v1723 = vld [vmem:[#allocation4 + $0x68] sm:$0xff]
        %v1724 = vld [vmem:[#allocation4 + $0x70] sm:$0xff]
        %v1725 = vld [vmem:[#allocation4 + $0x78] sm:$0xff]
        %v1726 = vld [vmem:[#allocation4 + $0x80] sm:$0xff]
        %v1727 = vld [vmem:[#allocation2 + $0x10] sm:$0xff]
        %v1728 = vld [vmem:[#allocation2 + $0x18] sm:$0xff]
        %v1729 = vld [vmem:[#allocation2 + $0x20] sm:$0xff]
        %v1730 = vld [vmem:[#allocation2 + $0x28] sm:$0xff]
        %v1731 = vld [vmem:[#allocation2 + $0x30] sm:$0xff]
        %v1732 = vld [vmem:[#allocation2 + $0x38] sm:$0xff]
        %v1733 = vld [vmem:[#allocation2 + $0x40] sm:$0xff]
        %v1734 = vld [vmem:[#allocation2 + $0x48] sm:$0xff]
        %v1735 = vld [vmem:[#allocation2 + $0x50] sm:$0xff]
        %v1736 = vld [vmem:[#allocation2 + $0x58] sm:$0xff]
        %v1737 = vld [vmem:[#allocation2 + $0x60] sm:$0xff]
        %v1738 = vld [vmem:[#allocation2 + $0x68] sm:$0xff]
        %v1739 = vld [vmem:[#allocation2 + $0x70] sm:$0xff]
        %v1740 = vld [vmem:[#allocation2 + $0x78] sm:$0xff]
        %v1741 = vld [vmem:[#allocation2 + $0x80] sm:$0xff]
        %v1742 = vld [vmem:[#allocation2 + $0x88] sm:$0xff]
        %v1743 = vld [vmem:[#allocation3 + $0x88] sm:$0xff]
        %1760 = vrot.lane.b32.xlu0 %v1711, 32
        %v1761 = vpop.permute.xlu0 %1760
        %1762 = vrot.lane.b32.xlu0 %v1712, 32
        %v1763 = vpop.permute.xlu0 %1762
        %1764 = vrot.lane.b32.xlu0 %v1713, 32
        %v1765 = vpop.permute.xlu0 %1764
        %1766 = vrot.lane.b32.xlu0 %v1714, 32
        %v1767 = vpop.permute.xlu0 %1766
        %1768 = vrot.lane.b32.xlu0 %v1715, 32
        %v1769 = vpop.permute.xlu0 %1768
        %1770 = vrot.lane.b32.xlu0 %v1716, 32
        %v1771 = vpop.permute.xlu0 %1770
        %1772 = vrot.lane.b32.xlu0 %v1717, 32
        %v1773 = vpop.permute.xlu0 %1772
        %1774 = vrot.lane.b32.xlu0 %v1718, 32
        %v1775 = vpop.permute.xlu0 %1774
        %1776 = vrot.lane.b32.xlu0 %v1719, 32
        %v1777 = vpop.permute.xlu0 %1776
        %1778 = vrot.lane.b32.xlu0 %v1720, 32
        %v1779 = vpop.permute.xlu0 %1778
        %1780 = vrot.lane.b32.xlu0 %v1721, 32
        %v1781 = vpop.permute.xlu0 %1780
        %1782 = vrot.lane.b32.xlu0 %v1722, 32
        %v1783 = vpop.permute.xlu0 %1782
        %1784 = vrot.lane.b32.xlu0 %v1723, 32
        %v1785 = vpop.permute.xlu0 %1784
        %1786 = vrot.lane.b32.xlu0 %v1724, 32
        %v1787 = vpop.permute.xlu0 %1786
        %1788 = vrot.lane.b32.xlu0 %v1725, 32
        %v1789 = vpop.permute.xlu0 %1788
        %1790 = vrot.lane.b32.xlu0 %v1726, 32
        %v1791 = vpop.permute.xlu0 %1790
        %1808 = vrot.lane.b32.xlu0 %v1727, 64
        %v1809 = vpop.permute.xlu0 %1808
        %1810 = vrot.lane.b32.xlu0 %v1728, 64
        %v1811 = vpop.permute.xlu0 %1810
        %1812 = vrot.lane.b32.xlu0 %v1729, 64
        %v1813 = vpop.permute.xlu0 %1812
        %1814 = vrot.lane.b32.xlu0 %v1730, 64
        %v1815 = vpop.permute.xlu0 %1814
        %1816 = vrot.lane.b32.xlu0 %v1731, 64
        %v1817 = vpop.permute.xlu0 %1816
        %1818 = vrot.lane.b32.xlu0 %v1732, 64
        %v1819 = vpop.permute.xlu0 %1818
        %1820 = vrot.lane.b32.xlu0 %v1733, 64
        %v1821 = vpop.permute.xlu0 %1820
        %1822 = vrot.lane.b32.xlu0 %v1734, 64
        %v1823 = vpop.permute.xlu0 %1822
        %1824 = vrot.lane.b32.xlu0 %v1735, 64
        %v1825 = vpop.permute.xlu0 %1824
        %1826 = vrot.lane.b32.xlu0 %v1736, 64
        %v1827 = vpop.permute.xlu0 %1826
        %1828 = vrot.lane.b32.xlu0 %v1737, 64
        %v1829 = vpop.permute.xlu0 %1828
        %1830 = vrot.lane.b32.xlu0 %v1738, 64
        %v1831 = vpop.permute.xlu0 %1830
        %1832 = vrot.lane.b32.xlu0 %v1739, 64
        %v1833 = vpop.permute.xlu0 %1832
        %1834 = vrot.lane.b32.xlu0 %v1740, 64
        %v1835 = vpop.permute.xlu0 %1834
        %1836 = vrot.lane.b32.xlu0 %v1741, 64
        %v1837 = vpop.permute.xlu0 %1836
        %1838 = vrot.lane.b32.xlu0 %v1742, 64
        %v1839 = vpop.permute.xlu0 %1838
        %1856 = vrot.lane.b32.xlu0 %v1696, 96
        %v1857 = vpop.permute.xlu0 %1856
        %1858 = vrot.lane.b32.xlu0 %v1697, 96
        %v1859 = vpop.permute.xlu0 %1858
        %1860 = vrot.lane.b32.xlu0 %v1698, 96
        %v1861 = vpop.permute.xlu0 %1860
        %1862 = vrot.lane.b32.xlu0 %v1699, 96
        %v1863 = vpop.permute.xlu0 %1862
        %1864 = vrot.lane.b32.xlu0 %v1700, 96
        %v1865 = vpop.permute.xlu0 %1864
        %1866 = vrot.lane.b32.xlu0 %v1701, 96
        %v1867 = vpop.permute.xlu0 %1866
        %1868 = vrot.lane.b32.xlu0 %v1702, 96
        %v1869 = vpop.permute.xlu0 %1868
        %1870 = vrot.lane.b32.xlu0 %v1703, 96
        %v1871 = vpop.permute.xlu0 %1870
        %1872 = vrot.lane.b32.xlu0 %v1704, 96
        %v1873 = vpop.permute.xlu0 %1872
        %1874 = vrot.lane.b32.xlu0 %v1705, 96
        %v1875 = vpop.permute.xlu0 %1874
        %1876 = vrot.lane.b32.xlu0 %v1706, 96
        %v1877 = vpop.permute.xlu0 %1876
        %1878 = vrot.lane.b32.xlu0 %v1707, 96
        %v1879 = vpop.permute.xlu0 %1878
        %1880 = vrot.lane.b32.xlu0 %v1708, 96
        %v1881 = vpop.permute.xlu0 %1880
        %1882 = vrot.lane.b32.xlu0 %v1709, 96
        %v1883 = vpop.permute.xlu0 %1882
        %1884 = vrot.lane.b32.xlu0 %v1710, 96
        %v1885 = vpop.permute.xlu0 %1884
        %1886 = vrot.lane.b32.xlu0 %v1743, 96
        %v1887 = vpop.permute.xlu0 %1886
        %v1890 = vsel %vm1253, %v1695, %v1761
        %v1893 = vsel %vm1253, %v1696, %v1763
        %v1896 = vsel %vm1253, %v1697, %v1765
        %v1899 = vsel %vm1253, %v1698, %v1767
        %v1902 = vsel %vm1253, %v1699, %v1769
        %v1905 = vsel %vm1253, %v1700, %v1771
        %v1908 = vsel %vm1253, %v1701, %v1773
        %v1911 = vsel %vm1253, %v1702, %v1775
        %v1914 = vsel %vm1253, %v1703, %v1777
        %v1917 = vsel %vm1253, %v1704, %v1779
        %v1920 = vsel %vm1253, %v1705, %v1781
        %v1923 = vsel %vm1253, %v1706, %v1783
        %v1926 = vsel %vm1253, %v1707, %v1785
        %v1929 = vsel %vm1253, %v1708, %v1787
        %v1932 = vsel %vm1253, %v1709, %v1789
        %v1935 = vsel %vm1253, %v1710, %v1791
        %v1937 = vsel %vm1597, %v1890, %v1809
        %v1939 = vsel %vm1597, %v1893, %v1811
        %v1941 = vsel %vm1597, %v1896, %v1813
        %v1943 = vsel %vm1597, %v1899, %v1815
        %v1945 = vsel %vm1597, %v1902, %v1817
        %v1947 = vsel %vm1597, %v1905, %v1819
        %v1949 = vsel %vm1597, %v1908, %v1821
        %v1951 = vsel %vm1597, %v1911, %v1823
        %v1953 = vsel %vm1597, %v1914, %v1825
        %v1955 = vsel %vm1597, %v1917, %v1827
        %v1957 = vsel %vm1597, %v1920, %v1829
        %v1959 = vsel %vm1597, %v1923, %v1831
        %v1961 = vsel %vm1597, %v1926, %v1833
        %v1963 = vsel %vm1597, %v1929, %v1835
        %v1965 = vsel %vm1597, %v1932, %v1837
        %v1967 = vsel %vm1597, %v1935, %v1839
        %v1969 = vsel %vm1630, %v1937, %v1857
        %v1972 = vsel %vm1630, %v1939, %v1859
        %v1975 = vsel %vm1630, %v1941, %v1861
        %v1978 = vsel %vm1630, %v1943, %v1863
        %v1981 = vsel %vm1630, %v1945, %v1865
        %v1984 = vsel %vm1630, %v1947, %v1867
        %v1987 = vsel %vm1630, %v1949, %v1869
        %v1990 = vsel %vm1630, %v1951, %v1871
        %v1993 = vsel %vm1630, %v1953, %v1873
        %v1996 = vsel %vm1630, %v1955, %v1875
        %v1999 = vsel %vm1630, %v1957, %v1877
        %v2002 = vsel %vm1630, %v1959, %v1879
        %v2005 = vsel %vm1630, %v1961, %v1881
        %v2008 = vsel %vm1630, %v1963, %v1883
        %v2011 = vsel %vm1630, %v1965, %v1885
        %v2014 = vsel %vm1630, %v1967, %v1887
        %2016 = vst [vmem:[#allocation5 + $0x8] sm:$0xff] %v1969
        %2017 = vst [vmem:[#allocation5 + $0x18] sm:$0xff] %v1972
        %2018 = vst [vmem:[#allocation5 + $0x28] sm:$0xff] %v1975
        %2019 = vst [vmem:[#allocation5 + $0x38] sm:$0xff] %v1978
        %2020 = vst [vmem:[#allocation5 + $0x48] sm:$0xff] %v1981
        %2021 = vst [vmem:[#allocation5 + $0x58] sm:$0xff] %v1984
        %2022 = vst [vmem:[#allocation5 + $0x68] sm:$0xff] %v1987
        %2023 = vst [vmem:[#allocation5 + $0x78] sm:$0xff] %v1990
        %2024 = vst [vmem:[#allocation5 + $0x88] sm:$0xff] %v1993
        %2025 = vst [vmem:[#allocation5 + $0x98] sm:$0xff] %v1996
        %2026 = vst [vmem:[#allocation5 + $0xa8] sm:$0xff] %v1999
        %2027 = vst [vmem:[#allocation5 + $0xb8] sm:$0xff] %v2002
        %2028 = vst [vmem:[#allocation5 + $0xc8] sm:$0xff] %v2005
        %2029 = vst [vmem:[#allocation5 + $0xd8] sm:$0xff] %v2008
        %2030 = vst [vmem:[#allocation5 + $0xe8] sm:$0xff] %v2011
        %2031 = vst [vmem:[#allocation5 + $0xf8] sm:$0xff] %v2014
        %v2032 = vld [vmem:[#allocation5] sm:$0xff]
        %v2033 = vld [vmem:[#allocation5 + $0x8] sm:$0xff]
        %v2034 = vld [vmem:[#allocation5 + $0x10] sm:$0xff]
        %v2035 = vld [vmem:[#allocation5 + $0x18] sm:$0xff]
        %v2036 = vld [vmem:[#allocation5 + $0x20] sm:$0xff]
        %v2037 = vld [vmem:[#allocation5 + $0x28] sm:$0xff]
        %v2038 = vld [vmem:[#allocation5 + $0x30] sm:$0xff]
        %v2039 = vld [vmem:[#allocation5 + $0x38] sm:$0xff]
        %v2040 = vld [vmem:[#allocation5 + $0x40] sm:$0xff]
        %v2041 = vld [vmem:[#allocation5 + $0x48] sm:$0xff]
        %v2042 = vld [vmem:[#allocation5 + $0x50] sm:$0xff]
        %v2043 = vld [vmem:[#allocation5 + $0x58] sm:$0xff]
        %v2044 = vld [vmem:[#allocation5 + $0x60] sm:$0xff]
        %v2045 = vld [vmem:[#allocation5 + $0x68] sm:$0xff]
        %v2046 = vld [vmem:[#allocation5 + $0x70] sm:$0xff]
        %v2047 = vld [vmem:[#allocation5 + $0x78] sm:$0xff]
        %v2048 = vld [vmem:[#allocation5 + $0x80] sm:$0xff]
        %v2049 = vld [vmem:[#allocation5 + $0x88] sm:$0xff]
        %v2050 = vld [vmem:[#allocation5 + $0x90] sm:$0xff]
        %v2051 = vld [vmem:[#allocation5 + $0x98] sm:$0xff]
        %v2052 = vld [vmem:[#allocation5 + $0xa0] sm:$0xff]
        %v2053 = vld [vmem:[#allocation5 + $0xa8] sm:$0xff]
        %v2054 = vld [vmem:[#allocation5 + $0xb0] sm:$0xff]
        %v2055 = vld [vmem:[#allocation5 + $0xb8] sm:$0xff]
        %v2056 = vld [vmem:[#allocation5 + $0xc0] sm:$0xff]
        %v2057 = vld [vmem:[#allocation5 + $0xc8] sm:$0xff]
        %v2058 = vld [vmem:[#allocation5 + $0xd0] sm:$0xff]
        %v2059 = vld [vmem:[#allocation5 + $0xd8] sm:$0xff]
        %v2060 = vld [vmem:[#allocation5 + $0xe0] sm:$0xff]
        %v2061 = vld [vmem:[#allocation5 + $0xe8] sm:$0xff]
        %v2062 = vld [vmem:[#allocation5 + $0xf0] sm:$0xff]
        %v2063 = vld [vmem:[#allocation5 + $0xf8] sm:$0xff]
        %v2064 = vld [vmem:[%s2] sm:$0xf]
        %v2065 = vld [vmem:[%s2 + $0x4] sm:$0xf]
        %v2066 = vld [vmem:[%s2 + $0x8] sm:$0xf]
        %v2067 = vld [vmem:[%s2 + $0xc] sm:$0xf]
        %v2068 = vld [vmem:[%s2 + $0x10] sm:$0xf]
        %v2069 = vld [vmem:[%s2 + $0x14] sm:$0xf]
        %v2070 = vld [vmem:[%s2 + $0x18] sm:$0xf]
        %v2071 = vld [vmem:[%s2 + $0x1c] sm:$0xf]
        %v2072 = vld [vmem:[%s2 + $0x20] sm:$0xf]
        %v2073 = vld [vmem:[%s2 + $0x24] sm:$0xf]
        %v2074 = vld [vmem:[%s2 + $0x28] sm:$0xf]
        %v2075 = vld [vmem:[%s2 + $0x2c] sm:$0xf]
        %v2076 = vld [vmem:[%s2 + $0x30] sm:$0xf]
        %v2077 = vld [vmem:[%s2 + $0x34] sm:$0xf]
        %v2078 = vld [vmem:[%s2 + $0x38] sm:$0xf]
        %v2079 = vld [vmem:[%s2 + $0x3c] sm:$0xf]
        %v2080 = vld [vmem:[%s2 + $0x40] sm:$0xf]
        %v2081 = vld [vmem:[%s2 + $0x44] sm:$0xf]
        %v2082 = vld [vmem:[%s2 + $0x48] sm:$0xf]
        %v2083 = vld [vmem:[%s2 + $0x4c] sm:$0xf]
        %v2084 = vld [vmem:[%s2 + $0x50] sm:$0xf]
        %v2085 = vld [vmem:[%s2 + $0x54] sm:$0xf]
        %v2086 = vld [vmem:[%s2 + $0x58] sm:$0xf]
        %v2087 = vld [vmem:[%s2 + $0x5c] sm:$0xf]
        %v2088 = vld [vmem:[%s2 + $0x60] sm:$0xf]
        %v2089 = vld [vmem:[%s2 + $0x64] sm:$0xf]
        %v2090 = vld [vmem:[%s2 + $0x68] sm:$0xf]
        %v2091 = vld [vmem:[%s2 + $0x6c] sm:$0xf]
        %v2092 = vld [vmem:[%s2 + $0x70] sm:$0xf]
        %v2093 = vld [vmem:[%s2 + $0x74] sm:$0xf]
        %v2094 = vld [vmem:[%s2 + $0x78] sm:$0xf]
        %v2095 = vld [vmem:[%s2 + $0x7c] sm:$0xf]
        %v2096 = vld [vmem:[#allocation4 + $0x10] sm:$0xff]
        %v2097 = vld [vmem:[#allocation4 + $0x18] sm:$0xff]
        %v2098 = vld [vmem:[#allocation4 + $0x20] sm:$0xff]
        %v2099 = vld [vmem:[#allocation4 + $0x28] sm:$0xff]
        %v2100 = vld [vmem:[#allocation4 + $0x30] sm:$0xff]
        %v2101 = vld [vmem:[#allocation4 + $0x38] sm:$0xff]
        %v2102 = vld [vmem:[#allocation4 + $0x40] sm:$0xff]
        %v2103 = vld [vmem:[#allocation4 + $0x48] sm:$0xff]
        %v2104 = vld [vmem:[#allocation4 + $0x50] sm:$0xff]
        %v2105 = vld [vmem:[#allocation4 + $0x58] sm:$0xff]
        %v2106 = vld [vmem:[#allocation4 + $0x60] sm:$0xff]
        %v2107 = vld [vmem:[#allocation4 + $0x68] sm:$0xff]
        %v2108 = vld [vmem:[#allocation4 + $0x70] sm:$0xff]
        %v2109 = vld [vmem:[#allocation4 + $0x78] sm:$0xff]
        %v2110 = vld [vmem:[#allocation4 + $0x80] sm:$0xff]
        %v2111 = vld [vmem:[#allocation4 + $0x88] sm:$0xff]
        %v2112 = vld [vmem:[%s3] sm:$0xf]
        %v2113 = vld [vmem:[%s3 + $0x4] sm:$0xf]
        %v2114 = vld [vmem:[%s3 + $0x8] sm:$0xf]
        %v2115 = vld [vmem:[%s3 + $0xc] sm:$0xf]
        %v2120 = vunpack.c.l.b16 %v2112
        %v2121 = vunpack.c.l.b16 %v2113
        %v2122 = vunpack.c.l.b16 %v2114
        %v2123 = vunpack.c.l.b16 %v2115
        %v2124 = vpack.c.b16 %v2121, %v2120
        %v2125 = vpack.c.b16 %v2123, %v2122
        %v2129 = vsel %vm1253, %v2096, 0
        %v2132 = vsel %vm1253, %v2097, 0
        %v2135 = vsel %vm1253, %v2098, 0
        %v2138 = vsel %vm1253, %v2099, 0
        %v2141 = vsel %vm1253, %v2100, 0
        %v2144 = vsel %vm1253, %v2101, 0
        %v2147 = vsel %vm1253, %v2102, 0
        %v2150 = vsel %vm1253, %v2103, 0
        %v2153 = vsel %vm1253, %v2104, 0
        %v2156 = vsel %vm1253, %v2105, 0
        %v2159 = vsel %vm1253, %v2106, 0
        %v2162 = vsel %vm1253, %v2107, 0
        %v2165 = vsel %vm1253, %v2108, 0
        %v2168 = vsel %vm1253, %v2109, 0
        %v2171 = vsel %vm1253, %v2110, 0
        %v2174 = vsel %vm1253, %v2111, 0
        %2176 = vmatprep.subr.bf16.mxu0 0
        %2177 = vmatpush1.bf16.msra.mxu0 %v2124
        %2178 = vmatprep.subr.bf16.mxu0 0
        %2179 = vmatpush1.bf16.msra.mxu0 %v2125
        %2180 = vmatprep.subr.bf16.mxu0 0
        %2181 = vmatpush1.bf16.msra.mxu0 0
        %2182 = vmatprep.subr.bf16.mxu0 0
        %2183 = vmatpush1.bf16.msra.mxu0 0
        %2184 = vmatprep.subr.bf16.mxu0 0
        %2185 = vmatpush1.bf16.msra.mxu0 0
        %2186 = vmatprep.subr.bf16.mxu0 0
        %2187 = vmatpush1.bf16.msra.mxu0 0
        %2188 = vmatprep.subr.bf16.mxu0 0
        %2189 = vmatpush1.bf16.msra.mxu0 0
        %2190 = vmatprep.subr.bf16.mxu0 0
        %2191 = vmatpush1.bf16.msra.mxu0 0
        %2192 = vmatprep.subr.bf16.mxu0 0
        %2193 = vmatpush1.bf16.msra.mxu0 0
        %2194 = vmatprep.subr.bf16.mxu0 0
        %2195 = vmatpush1.bf16.msra.mxu0 0
        %2196 = vmatprep.subr.bf16.mxu0 0
        %2197 = vmatpush1.bf16.msra.mxu0 0
        %2198 = vmatprep.subr.bf16.mxu0 0
        %2199 = vmatpush1.bf16.msra.mxu0 0
        %2200 = vmatprep.subr.bf16.mxu0 0
        %2201 = vmatpush1.bf16.msra.mxu0 0
        %2202 = vmatprep.subr.bf16.mxu0 0
        %2203 = vmatpush1.bf16.msra.mxu0 0
        %2204 = vmatprep.subr.bf16.mxu0 0
        %2205 = vmatpush1.bf16.msra.mxu0 0
        %2206 = vmatprep.subr.bf16.mxu0 0
        %2207 = vmatpush1.bf16.msra.mxu0 0
        %2208 = vmatprep.mubr.bf16.mxu0 0
        %2209 = vmatmul.mubr.bf16.gmra.mrb[0].mxu0 %v2129
        %v2210 = vpop.f32.mrb[0].mxu0
        %v2211 = vadd.f32 0.0, %v2210
        %v2212 = vpop.f32.mrb[0].mxu0
        %v2213 = vpop.f32.mrb[0].mxu0
        %v2214 = vadd.f32 0.0, %v2213
        %v2215 = vpop.f32.mrb[0].mxu0
        %2216 = vmatprep.mubr.bf16.mxu0 0
        %2217 = vmatmul.mubr.bf16.gmra.mrb[0].mxu0 %v2132
        %v2218 = vpop.f32.mrb[0].mxu0
        %v2219 = vadd.f32 0.0, %v2218
        %v2220 = vpop.f32.mrb[0].mxu0
        %v2221 = vpop.f32.mrb[0].mxu0
        %v2222 = vadd.f32 0.0, %v2221
        %v2223 = vpop.f32.mrb[0].mxu0
        %2224 = vmatprep.mubr.bf16.mxu0 0
        %2225 = vmatmul.mubr.bf16.gmra.mrb[0].mxu0 %v2135
        %v2226 = vpop.f32.mrb[0].mxu0
        %v2227 = vadd.f32 0.0, %v2226
        %v2228 = vpop.f32.mrb[0].mxu0
        %v2229 = vpop.f32.mrb[0].mxu0
        %v2230 = vadd.f32 0.0, %v2229
        %v2231 = vpop.f32.mrb[0].mxu0
        %2232 = vmatprep.mubr.bf16.mxu0 0
        %2233 = vmatmul.mubr.bf16.gmra.mrb[0].mxu0 %v2138
        %v2234 = vpop.f32.mrb[0].mxu0
        %v2235 = vadd.f32 0.0, %v2234
        %v2236 = vpop.f32.mrb[0].mxu0
        %v2237 = vpop.f32.mrb[0].mxu0
        %v2238 = vadd.f32 0.0, %v2237
        %v2239 = vpop.f32.mrb[0].mxu0
        %2240 = vmatprep.mubr.bf16.mxu0 0
        %2241 = vmatmul.mubr.bf16.gmra.mrb[0].mxu0 %v2141
        %v2242 = vpop.f32.mrb[0].mxu0
        %v2243 = vadd.f32 0.0, %v2242
        %v2244 = vpop.f32.mrb[0].mxu0
        %v2245 = vpop.f32.mrb[0].mxu0
        %v2246 = vadd.f32 0.0, %v2245
        %v2247 = vpop.f32.mrb[0].mxu0
        %2248 = vmatprep.mubr.bf16.mxu0 0
        %2249 = vmatmul.mubr.bf16.gmra.mrb[0].mxu0 %v2144
        %v2250 = vpop.f32.mrb[0].mxu0
        %v2251 = vadd.f32 0.0, %v2250
        %v2252 = vpop.f32.mrb[0].mxu0
        %v2253 = vpop.f32.mrb[0].mxu0
        %v2254 = vadd.f32 0.0, %v2253
        %v2255 = vpop.f32.mrb[0].mxu0
        %2256 = vmatprep.mubr.bf16.mxu0 0
        %2257 = vmatmul.mubr.bf16.gmra.mrb[0].mxu0 %v2147
        %v2258 = vpop.f32.mrb[0].mxu0
        %v2259 = vadd.f32 0.0, %v2258
        %v2260 = vpop.f32.mrb[0].mxu0
        %v2261 = vpop.f32.mrb[0].mxu0
        %v2262 = vadd.f32 0.0, %v2261
        %v2263 = vpop.f32.mrb[0].mxu0
        %2264 = vmatprep.mubr.bf16.mxu0 0
        %2265 = vmatmul.mubr.bf16.gmra.mrb[0].mxu0 %v2150
        %v2266 = vpop.f32.mrb[0].mxu0
        %v2267 = vadd.f32 0.0, %v2266
        %v2268 = vpop.f32.mrb[0].mxu0
        %v2269 = vpop.f32.mrb[0].mxu0
        %v2270 = vadd.f32 0.0, %v2269
        %v2271 = vpop.f32.mrb[0].mxu0
        %2272 = vmatprep.mubr.bf16.mxu0 0
        %2273 = vmatmul.mubr.bf16.gmra.mrb[0].mxu0 %v2153
        %v2274 = vpop.f32.mrb[0].mxu0
        %v2275 = vadd.f32 0.0, %v2274
        %v2276 = vpop.f32.mrb[0].mxu0
        %v2277 = vpop.f32.mrb[0].mxu0
        %v2278 = vadd.f32 0.0, %v2277
        %v2279 = vpop.f32.mrb[0].mxu0
        %2280 = vmatprep.mubr.bf16.mxu0 0
        %2281 = vmatmul.mubr.bf16.gmra.mrb[0].mxu0 %v2156
        %v2282 = vpop.f32.mrb[0].mxu0
        %v2283 = vadd.f32 0.0, %v2282
        %v2284 = vpop.f32.mrb[0].mxu0
        %v2285 = vpop.f32.mrb[0].mxu0
        %v2286 = vadd.f32 0.0, %v2285
        %v2287 = vpop.f32.mrb[0].mxu0
        %2288 = vmatprep.mubr.bf16.mxu0 0
        %2289 = vmatmul.mubr.bf16.gmra.mrb[0].mxu0 %v2159
        %v2290 = vpop.f32.mrb[0].mxu0
        %v2291 = vadd.f32 0.0, %v2290
        %v2292 = vpop.f32.mrb[0].mxu0
        %v2293 = vpop.f32.mrb[0].mxu0
        %v2294 = vadd.f32 0.0, %v2293
        %v2295 = vpop.f32.mrb[0].mxu0
        %2296 = vmatprep.mubr.bf16.mxu0 0
        %2297 = vmatmul.mubr.bf16.gmra.mrb[0].mxu0 %v2162
        %v2298 = vpop.f32.mrb[0].mxu0
        %v2299 = vadd.f32 0.0, %v2298
        %v2300 = vpop.f32.mrb[0].mxu0
        %v2301 = vpop.f32.mrb[0].mxu0
        %v2302 = vadd.f32 0.0, %v2301
        %v2303 = vpop.f32.mrb[0].mxu0
        %2304 = vmatprep.mubr.bf16.mxu0 0
        %2305 = vmatmul.mubr.bf16.gmra.mrb[0].mxu0 %v2165
        %v2306 = vpop.f32.mrb[0].mxu0
        %v2307 = vadd.f32 0.0, %v2306
        %v2308 = vpop.f32.mrb[0].mxu0
        %v2309 = vpop.f32.mrb[0].mxu0
        %v2310 = vadd.f32 0.0, %v2309
        %v2311 = vpop.f32.mrb[0].mxu0
        %2312 = vmatprep.mubr.bf16.mxu0 0
        %2313 = vmatmul.mubr.bf16.gmra.mrb[0].mxu0 %v2168
        %v2314 = vpop.f32.mrb[0].mxu0
        %v2315 = vadd.f32 0.0, %v2314
        %v2316 = vpop.f32.mrb[0].mxu0
        %v2317 = vpop.f32.mrb[0].mxu0
        %v2318 = vadd.f32 0.0, %v2317
        %v2319 = vpop.f32.mrb[0].mxu0
        %2320 = vmatprep.mubr.bf16.mxu0 0
        %2321 = vmatmul.mubr.bf16.gmra.mrb[0].mxu0 %v2171
        %v2322 = vpop.f32.mrb[0].mxu0
        %v2323 = vadd.f32 0.0, %v2322
        %v2324 = vpop.f32.mrb[0].mxu0
        %v2325 = vpop.f32.mrb[0].mxu0
        %v2326 = vadd.f32 0.0, %v2325
        %v2327 = vpop.f32.mrb[0].mxu0
        %2328 = vmatprep.mubr.bf16.mxu0 0
        %2329 = vmatmul.mubr.bf16.gmra.mrb[0].mxu0 %v2174
        %v2330 = vpop.f32.mrb[0].mxu0
        %v2331 = vadd.f32 0.0, %v2330
        %v2332 = vpop.f32.mrb[0].mxu0
        %v2333 = vpop.f32.mrb[0].mxu0
        %v2334 = vadd.f32 0.0, %v2333
        %v2335 = vpop.f32.mrb[0].mxu0
        %2336 = vdwg.mxu0
        %v2369 = vunpack.c.l.b16 %v2064
        %v2370 = vunpack.c.l.b16 %v2065
        %v2371 = vunpack.c.l.b16 %v2066
        %v2372 = vunpack.c.l.b16 %v2067
        %v2373 = vunpack.c.l.b16 %v2068
        %v2374 = vunpack.c.l.b16 %v2069
        %v2375 = vunpack.c.l.b16 %v2070
        %v2376 = vunpack.c.l.b16 %v2071
        %v2377 = vunpack.c.l.b16 %v2072
        %v2378 = vunpack.c.l.b16 %v2073
        %v2379 = vunpack.c.l.b16 %v2074
        %v2380 = vunpack.c.l.b16 %v2075
        %v2381 = vunpack.c.l.b16 %v2076
        %v2382 = vunpack.c.l.b16 %v2077
        %v2383 = vunpack.c.l.b16 %v2078
        %v2384 = vunpack.c.l.b16 %v2079
        %v2385 = vunpack.c.l.b16 %v2080
        %v2386 = vunpack.c.l.b16 %v2081
        %v2387 = vunpack.c.l.b16 %v2082
        %v2388 = vunpack.c.l.b16 %v2083
        %v2389 = vunpack.c.l.b16 %v2084
        %v2390 = vunpack.c.l.b16 %v2085
        %v2391 = vunpack.c.l.b16 %v2086
        %v2392 = vunpack.c.l.b16 %v2087
        %v2393 = vunpack.c.l.b16 %v2088
        %v2394 = vunpack.c.l.b16 %v2089
        %v2395 = vunpack.c.l.b16 %v2090
        %v2396 = vunpack.c.l.b16 %v2091
        %v2397 = vunpack.c.l.b16 %v2092
        %v2398 = vunpack.c.l.b16 %v2093
        %v2399 = vunpack.c.l.b16 %v2094
        %v2400 = vunpack.c.l.b16 %v2095
        %v2401 = vpack.c.b16 %v2370, %v2369
        %v2402 = vpack.c.b16 %v2372, %v2371
        %v2403 = vpack.c.b16 %v2374, %v2373
        %v2404 = vpack.c.b16 %v2376, %v2375
        %v2405 = vpack.c.b16 %v2378, %v2377
        %v2406 = vpack.c.b16 %v2380, %v2379
        %v2407 = vpack.c.b16 %v2382, %v2381
        %v2408 = vpack.c.b16 %v2384, %v2383
        %v2409 = vpack.c.b16 %v2386, %v2385
        %v2410 = vpack.c.b16 %v2388, %v2387
        %v2411 = vpack.c.b16 %v2390, %v2389
        %v2412 = vpack.c.b16 %v2392, %v2391
        %v2413 = vpack.c.b16 %v2394, %v2393
        %v2414 = vpack.c.b16 %v2396, %v2395
        %v2415 = vpack.c.b16 %v2398, %v2397
        %v2416 = vpack.c.b16 %v2400, %v2399
        %2433 = vmatprep.subr.bf16.mxu0 0
        %2434 = vmatpush1.bf16.msra.mxu0 %v2401
        %2435 = vmatprep.subr.bf16.mxu0 0
        %2436 = vmatpush1.bf16.msra.mxu0 %v2402
        %2437 = vmatprep.subr.bf16.mxu0 0
        %2438 = vmatpush1.bf16.msra.mxu0 %v2403
        %2439 = vmatprep.subr.bf16.mxu0 0
        %2440 = vmatpush1.bf16.msra.mxu0 %v2404
        %2441 = vmatprep.subr.bf16.mxu0 0
        %2442 = vmatpush1.bf16.msra.mxu0 %v2405
        %2443 = vmatprep.subr.bf16.mxu0 0
        %2444 = vmatpush1.bf16.msra.mxu0 %v2406
        %2445 = vmatprep.subr.bf16.mxu0 0
        %2446 = vmatpush1.bf16.msra.mxu0 %v2407
        %2447 = vmatprep.subr.bf16.mxu0 0
        %2448 = vmatpush1.bf16.msra.mxu0 %v2408
        %2449 = vmatprep.subr.bf16.mxu0 0
        %2450 = vmatpush1.bf16.msra.mxu0 %v2409
        %2451 = vmatprep.subr.bf16.mxu0 0
        %2452 = vmatpush1.bf16.msra.mxu0 %v2410
        %2453 = vmatprep.subr.bf16.mxu0 0
        %2454 = vmatpush1.bf16.msra.mxu0 %v2411
        %2455 = vmatprep.subr.bf16.mxu0 0
        %2456 = vmatpush1.bf16.msra.mxu0 %v2412
        %2457 = vmatprep.subr.bf16.mxu0 0
        %2458 = vmatpush1.bf16.msra.mxu0 %v2413
        %2459 = vmatprep.subr.bf16.mxu0 0
        %2460 = vmatpush1.bf16.msra.mxu0 %v2414
        %2461 = vmatprep.subr.bf16.mxu0 0
        %2462 = vmatpush1.bf16.msra.mxu0 %v2415
        %2463 = vmatprep.subr.bf16.mxu0 0
        %2464 = vmatpush1.bf16.msra.mxu0 %v2416
        %2465 = vmatprep.mubr.bf16.mxu0 %v2033
        %2466 = vmatmul.mubr.bf16.gmra.mrb[0].mxu0 %v2032
        %v2467 = vpop.f32.mrb[0].mxu0
        %v2468 = vadd.f32 %v2211, %v2467
        %v2469 = vpop.f32.mrb[0].mxu0
        %v2470 = vpop.f32.mrb[0].mxu0
        %v2471 = vadd.f32 %v2214, %v2470
        %v2472 = vpop.f32.mrb[0].mxu0
        %2473 = vmatprep.mubr.bf16.mxu0 %v2035
        %2474 = vmatmul.mubr.bf16.gmra.mrb[0].mxu0 %v2034
        %v2475 = vpop.f32.mrb[0].mxu0
        %v2476 = vadd.f32 %v2219, %v2475
        %v2477 = vpop.f32.mrb[0].mxu0
        %v2478 = vpop.f32.mrb[0].mxu0
        %v2479 = vadd.f32 %v2222, %v2478
        %v2480 = vpop.f32.mrb[0].mxu0
        %2481 = vmatprep.mubr.bf16.mxu0 %v2037
        %2482 = vmatmul.mubr.bf16.gmra.mrb[0].mxu0 %v2036
        %v2483 = vpop.f32.mrb[0].mxu0
        %v2484 = vadd.f32 %v2227, %v2483
        %v2485 = vpop.f32.mrb[0].mxu0
        %v2486 = vpop.f32.mrb[0].mxu0
        %v2487 = vadd.f32 %v2230, %v2486
        %v2488 = vpop.f32.mrb[0].mxu0
        %2489 = vmatprep.mubr.bf16.mxu0 %v2039
        %2490 = vmatmul.mubr.bf16.gmra.mrb[0].mxu0 %v2038
        %v2491 = vpop.f32.mrb[0].mxu0
        %v2492 = vadd.f32 %v2235, %v2491
        %v2493 = vpop.f32.mrb[0].mxu0
        %v2494 = vpop.f32.mrb[0].mxu0
        %v2495 = vadd.f32 %v2238, %v2494
        %v2496 = vpop.f32.mrb[0].mxu0
        %2497 = vmatprep.mubr.bf16.mxu0 %v2041
        %2498 = vmatmul.mubr.bf16.gmra.mrb[0].mxu0 %v2040
        %v2499 = vpop.f32.mrb[0].mxu0
        %v2500 = vadd.f32 %v2243, %v2499
        %v2501 = vpop.f32.mrb[0].mxu0
        %v2502 = vpop.f32.mrb[0].mxu0
        %v2503 = vadd.f32 %v2246, %v2502
        %v2504 = vpop.f32.mrb[0].mxu0
        %2505 = vmatprep.mubr.bf16.mxu0 %v2043
        %2506 = vmatmul.mubr.bf16.gmra.mrb[0].mxu0 %v2042
        %v2507 = vpop.f32.mrb[0].mxu0
        %v2508 = vadd.f32 %v2251, %v2507
        %v2509 = vpop.f32.mrb[0].mxu0
        %v2510 = vpop.f32.mrb[0].mxu0
        %v2511 = vadd.f32 %v2254, %v2510
        %v2512 = vpop.f32.mrb[0].mxu0
        %2513 = vmatprep.mubr.bf16.mxu0 %v2045
        %2514 = vmatmul.mubr.bf16.gmra.mrb[0].mxu0 %v2044
        %v2515 = vpop.f32.mrb[0].mxu0
        %v2516 = vadd.f32 %v2259, %v2515
        %v2517 = vpop.f32.mrb[0].mxu0
        %v2518 = vpop.f32.mrb[0].mxu0
        %v2519 = vadd.f32 %v2262, %v2518
        %v2520 = vpop.f32.mrb[0].mxu0
        %2521 = vmatprep.mubr.bf16.mxu0 %v2047
        %2522 = vmatmul.mubr.bf16.gmra.mrb[0].mxu0 %v2046
        %v2523 = vpop.f32.mrb[0].mxu0
        %v2524 = vadd.f32 %v2267, %v2523
        %v2525 = vpop.f32.mrb[0].mxu0
        %v2526 = vpop.f32.mrb[0].mxu0
        %v2527 = vadd.f32 %v2270, %v2526
        %v2528 = vpop.f32.mrb[0].mxu0
        %2529 = vmatprep.mubr.bf16.mxu0 %v2049
        %2530 = vmatmul.mubr.bf16.gmra.mrb[0].mxu0 %v2048
        %v2531 = vpop.f32.mrb[0].mxu0
        %v2532 = vadd.f32 %v2275, %v2531
        %v2533 = vpop.f32.mrb[0].mxu0
        %v2534 = vpop.f32.mrb[0].mxu0
        %v2535 = vadd.f32 %v2278, %v2534
        %v2536 = vpop.f32.mrb[0].mxu0
        %2537 = vmatprep.mubr.bf16.mxu0 %v2051
        %2538 = vmatmul.mubr.bf16.gmra.mrb[0].mxu0 %v2050
        %v2539 = vpop.f32.mrb[0].mxu0
        %v2540 = vadd.f32 %v2283, %v2539
        %v2541 = vpop.f32.mrb[0].mxu0
        %v2542 = vpop.f32.mrb[0].mxu0
        %v2543 = vadd.f32 %v2286, %v2542
        %v2544 = vpop.f32.mrb[0].mxu0
        %2545 = vmatprep.mubr.bf16.mxu0 %v2053
        %2546 = vmatmul.mubr.bf16.gmra.mrb[0].mxu0 %v2052
        %v2547 = vpop.f32.mrb[0].mxu0
        %v2548 = vadd.f32 %v2291, %v2547
        %v2549 = vpop.f32.mrb[0].mxu0
        %v2550 = vpop.f32.mrb[0].mxu0
        %v2551 = vadd.f32 %v2294, %v2550
        %v2552 = vpop.f32.mrb[0].mxu0
        %2553 = vmatprep.mubr.bf16.mxu0 %v2055
        %2554 = vmatmul.mubr.bf16.gmra.mrb[0].mxu0 %v2054
        %v2555 = vpop.f32.mrb[0].mxu0
        %v2556 = vadd.f32 %v2299, %v2555
        %v2557 = vpop.f32.mrb[0].mxu0
        %v2558 = vpop.f32.mrb[0].mxu0
        %v2559 = vadd.f32 %v2302, %v2558
        %v2560 = vpop.f32.mrb[0].mxu0
        %2561 = vmatprep.mubr.bf16.mxu0 %v2057
        %2562 = vmatmul.mubr.bf16.gmra.mrb[0].mxu0 %v2056
        %v2563 = vpop.f32.mrb[0].mxu0
        %v2564 = vadd.f32 %v2307, %v2563
        %v2565 = vpop.f32.mrb[0].mxu0
        %v2566 = vpop.f32.mrb[0].mxu0
        %v2567 = vadd.f32 %v2310, %v2566
        %v2568 = vpop.f32.mrb[0].mxu0
        %2569 = vmatprep.mubr.bf16.mxu0 %v2059
        %2570 = vmatmul.mubr.bf16.gmra.mrb[0].mxu0 %v2058
        %v2571 = vpop.f32.mrb[0].mxu0
        %v2572 = vadd.f32 %v2315, %v2571
        %v2573 = vpop.f32.mrb[0].mxu0
        %v2574 = vpop.f32.mrb[0].mxu0
        %v2575 = vadd.f32 %v2318, %v2574
        %v2576 = vpop.f32.mrb[0].mxu0
        %2577 = vmatprep.mubr.bf16.mxu0 %v2061
        %2578 = vmatmul.mubr.bf16.gmra.mrb[0].mxu0 %v2060
        %v2579 = vpop.f32.mrb[0].mxu0
        %v2580 = vadd.f32 %v2323, %v2579
        %v2581 = vpop.f32.mrb[0].mxu0
        %v2582 = vpop.f32.mrb[0].mxu0
        %v2583 = vadd.f32 %v2326, %v2582
        %v2584 = vpop.f32.mrb[0].mxu0
        %2585 = vmatprep.mubr.bf16.mxu0 %v2063
        %2586 = vmatmul.mubr.bf16.gmra.mrb[0].mxu0 %v2062
        %v2587 = vpop.f32.mrb[0].mxu0
        %v2588 = vadd.f32 %v2331, %v2587
        %v2589 = vpop.f32.mrb[0].mxu0
        %v2590 = vpop.f32.mrb[0].mxu0
        %v2591 = vadd.f32 %v2334, %v2590
        %v2592 = vpop.f32.mrb[0].mxu0
        %2593 = vdwg.mxu0
        %v2594 = vld [vmem:[%s4] sm:$0x1]
        %v2596 = vlaneseq
        %v2597 = vshrl.u32 %v2596, 7
        %v2598 = vsub.s32 0, %v2597
        %v2599 = vrot.slane %v2594, %v2598
        %v2601 = vmul.f32 %v2468, %v2599
        %v2602 = vmul.f32 %v2471, %v2599
        %v2603 = vmul.f32 %v2476, %v2599
        %v2604 = vmul.f32 %v2479, %v2599
        %v2605 = vmul.f32 %v2484, %v2599
        %v2606 = vmul.f32 %v2487, %v2599
        %v2607 = vmul.f32 %v2492, %v2599
        %v2608 = vmul.f32 %v2495, %v2599
        %v2609 = vmul.f32 %v2500, %v2599
        %v2610 = vmul.f32 %v2503, %v2599
        %v2611 = vmul.f32 %v2508, %v2599
        %v2612 = vmul.f32 %v2511, %v2599
        %v2613 = vmul.f32 %v2516, %v2599
        %v2614 = vmul.f32 %v2519, %v2599
        %v2615 = vmul.f32 %v2524, %v2599
        %v2616 = vmul.f32 %v2527, %v2599
        %v2617 = vmul.f32 %v2532, %v2599
        %v2618 = vmul.f32 %v2535, %v2599
        %v2619 = vmul.f32 %v2540, %v2599
        %v2620 = vmul.f32 %v2543, %v2599
        %v2621 = vmul.f32 %v2548, %v2599
        %v2622 = vmul.f32 %v2551, %v2599
        %v2623 = vmul.f32 %v2556, %v2599
        %v2624 = vmul.f32 %v2559, %v2599
        %v2625 = vmul.f32 %v2564, %v2599
        %v2626 = vmul.f32 %v2567, %v2599
        %v2627 = vmul.f32 %v2572, %v2599
        %v2628 = vmul.f32 %v2575, %v2599
        %v2629 = vmul.f32 %v2580, %v2599
        %v2630 = vmul.f32 %v2583, %v2599
        %v2631 = vmul.f32 %v2588, %v2599
        %v2632 = vmul.f32 %v2591, %v2599
        %v2633 = vld [vmem:[%s5] sm:$0x1]
        %v2635 = vlaneseq
        %v2636 = vshrl.u32 %v2635, 7
        %v2637 = vsub.s32 0, %v2636
        %v2638 = vrot.slane %v2633, %v2637
        %v2640 = vadd.f32 %v2601, %v2638
        %v2641 = vadd.f32 %v2602, %v2638
        %v2642 = vadd.f32 %v2603, %v2638
        %v2643 = vadd.f32 %v2604, %v2638
        %v2644 = vadd.f32 %v2605, %v2638
        %v2645 = vadd.f32 %v2606, %v2638
        %v2646 = vadd.f32 %v2607, %v2638
        %v2647 = vadd.f32 %v2608, %v2638
        %v2648 = vadd.f32 %v2609, %v2638
        %v2649 = vadd.f32 %v2610, %v2638
        %v2650 = vadd.f32 %v2611, %v2638
        %v2651 = vadd.f32 %v2612, %v2638
        %v2652 = vadd.f32 %v2613, %v2638
        %v2653 = vadd.f32 %v2614, %v2638
        %v2654 = vadd.f32 %v2615, %v2638
        %v2655 = vadd.f32 %v2616, %v2638
        %v2656 = vadd.f32 %v2617, %v2638
        %v2657 = vadd.f32 %v2618, %v2638
        %v2658 = vadd.f32 %v2619, %v2638
        %v2659 = vadd.f32 %v2620, %v2638
        %v2660 = vadd.f32 %v2621, %v2638
        %v2661 = vadd.f32 %v2622, %v2638
        %v2662 = vadd.f32 %v2623, %v2638
        %v2663 = vadd.f32 %v2624, %v2638
        %v2664 = vadd.f32 %v2625, %v2638
        %v2665 = vadd.f32 %v2626, %v2638
        %v2666 = vadd.f32 %v2627, %v2638
        %v2667 = vadd.f32 %v2628, %v2638
        %v2668 = vadd.f32 %v2629, %v2638
        %v2669 = vadd.f32 %v2630, %v2638
        %v2670 = vadd.f32 %v2631, %v2638
        %v2671 = vadd.f32 %v2632, %v2638
        %v2672 = vmax.f32 %v2640, 0.0
        %v2673 = vmax.f32 %v2641, 0.0
        %v2674 = vmax.f32 %v2642, 0.0
        %v2675 = vmax.f32 %v2643, 0.0
        %v2676 = vmax.f32 %v2644, 0.0
        %v2677 = vmax.f32 %v2645, 0.0
        %v2678 = vmax.f32 %v2646, 0.0
        %v2679 = vmax.f32 %v2647, 0.0
        %v2680 = vmax.f32 %v2648, 0.0
        %v2681 = vmax.f32 %v2649, 0.0
        %v2682 = vmax.f32 %v2650, 0.0
        %v2683 = vmax.f32 %v2651, 0.0
        %v2684 = vmax.f32 %v2652, 0.0
        %v2685 = vmax.f32 %v2653, 0.0
        %v2686 = vmax.f32 %v2654, 0.0
        %v2687 = vmax.f32 %v2655, 0.0
        %v2688 = vmax.f32 %v2656, 0.0
        %v2689 = vmax.f32 %v2657, 0.0
        %v2690 = vmax.f32 %v2658, 0.0
        %v2691 = vmax.f32 %v2659, 0.0
        %v2692 = vmax.f32 %v2660, 0.0
        %v2693 = vmax.f32 %v2661, 0.0
        %v2694 = vmax.f32 %v2662, 0.0
        %v2695 = vmax.f32 %v2663, 0.0
        %v2696 = vmax.f32 %v2664, 0.0
        %v2697 = vmax.f32 %v2665, 0.0
        %v2698 = vmax.f32 %v2666, 0.0
        %v2699 = vmax.f32 %v2667, 0.0
        %v2700 = vmax.f32 %v2668, 0.0
        %v2701 = vmax.f32 %v2669, 0.0
        %v2702 = vmax.f32 %v2670, 0.0
        %v2703 = vmax.f32 %v2671, 0.0
        %v2704 = vsel %vm1253, %v2672, 0.0
        %v2705 = vsel %vm1253, %v2673, 0.0
        %v2706 = vadd.f32 %v2704, %v2705
        %v2707 = vsel %vm1253, %v2674, 0.0
        %v2708 = vadd.f32 %v2706, %v2707
        %v2709 = vsel %vm1253, %v2675, 0.0
        %v2710 = vadd.f32 %v2708, %v2709
        %v2711 = vsel %vm1253, %v2676, 0.0
        %v2712 = vadd.f32 %v2710, %v2711
        %v2713 = vsel %vm1253, %v2677, 0.0
        %v2714 = vadd.f32 %v2712, %v2713
        %v2715 = vsel %vm1253, %v2678, 0.0
        %v2716 = vadd.f32 %v2714, %v2715
        %v2717 = vsel %vm1253, %v2679, 0.0
        %v2718 = vadd.f32 %v2716, %v2717
        %v2719 = vsel %vm1253, %v2680, 0.0
        %v2720 = vadd.f32 %v2718, %v2719
        %v2721 = vsel %vm1253, %v2681, 0.0
        %v2722 = vadd.f32 %v2720, %v2721
        %v2723 = vsel %vm1253, %v2682, 0.0
        %v2724 = vadd.f32 %v2722, %v2723
        %v2725 = vsel %vm1253, %v2683, 0.0
        %v2726 = vadd.f32 %v2724, %v2725
        %v2727 = vsel %vm1253, %v2684, 0.0
        %v2728 = vadd.f32 %v2726, %v2727
        %v2729 = vsel %vm1253, %v2685, 0.0
        %v2730 = vadd.f32 %v2728, %v2729
        %v2731 = vsel %vm1253, %v2686, 0.0
        %v2732 = vadd.f32 %v2730, %v2731
        %v2733 = vsel %vm1253, %v2687, 0.0
        %v2734 = vadd.f32 %v2732, %v2733
        %v2735 = vsel %vm1253, %v2688, 0.0
        %v2736 = vadd.f32 %v2734, %v2735
        %v2737 = vsel %vm1253, %v2689, 0.0
        %v2738 = vadd.f32 %v2736, %v2737
        %v2739 = vsel %vm1253, %v2690, 0.0
        %v2740 = vadd.f32 %v2738, %v2739
        %v2741 = vsel %vm1253, %v2691, 0.0
        %v2742 = vadd.f32 %v2740, %v2741
        %v2743 = vsel %vm1253, %v2692, 0.0
        %v2744 = vadd.f32 %v2742, %v2743
        %v2745 = vsel %vm1253, %v2693, 0.0
        %v2746 = vadd.f32 %v2744, %v2745
        %v2747 = vsel %vm1253, %v2694, 0.0
        %v2748 = vadd.f32 %v2746, %v2747
        %v2749 = vsel %vm1253, %v2695, 0.0
        %v2750 = vadd.f32 %v2748, %v2749
        %v2751 = vsel %vm1253, %v2696, 0.0
        %v2752 = vadd.f32 %v2750, %v2751
        %v2753 = vsel %vm1253, %v2697, 0.0
        %v2754 = vadd.f32 %v2752, %v2753
        %v2755 = vsel %vm1253, %v2698, 0.0
        %v2756 = vadd.f32 %v2754, %v2755
        %v2757 = vsel %vm1253, %v2699, 0.0
        %v2758 = vadd.f32 %v2756, %v2757
        %v2759 = vsel %vm1253, %v2700, 0.0
        %v2760 = vadd.f32 %v2758, %v2759
        %v2761 = vsel %vm1253, %v2701, 0.0
        %v2762 = vadd.f32 %v2760, %v2761
        %v2763 = vsel %vm1253, %v2702, 0.0
        %v2764 = vadd.f32 %v2762, %v2763
        %v2765 = vsel %vm1253, %v2703, 0.0
        %v2766 = vadd.f32 %v2764, %v2765
        %v2767 = vrot.slane %v2766, 4
        %v2768 = vadd.f32 %v2766, %v2767
        %v2769 = vrot.slane %v2768, 2
        %v2770 = vadd.f32 %v2768, %v2769
        %v2771 = vrot.slane %v2770, 1
        %v2772 = vadd.f32 %v2770, %v2771
        %v2773 = vrcp.pop 256.0
        %v2774 = vmul.f32 %v2772, %v2773
        %vm2775 = vcmask 270336
        %2776 = vst.msk [vmem:[#allocation6] sm:$0x1] %vm2775, 0.0
        %2778 = vrot.lane.b32.xlu0 %v2774, 1
        %v2779 = vpop.permute.xlu0 %2778
        %vm2781 = vcmask 262152
        %2782 = vst.msk [vmem:[#allocation6] sm:$0x1] %vm2781, %v2779
        %s2783 = sld [smem:[#allocation12]]
        %v2784 = vld [vmem:[#allocation6] sm:$0x1]
        %v2785 = vstv %s2783
        %v2786 = vmul.f32 %v2785, %v2784
        %s2787 = sld [smem:[#allocation12 + $0x1]]
        %v2788 = vstv %s2787
        %v2789 = vmul.f32 %v2788, %v2784
        %2791 = vrot.lane.b32.xlu0 %v2789, 127
        %v2792 = vpop.permute.xlu0 %2791
        %v2794 = vadd.f32 %v2786, %v2792
        %s2795 = sld [smem:[#allocation12 + $0x2]]
        %v2796 = vstv %s2795
        %v2797 = vmul.f32 %v2796, %v2784
        %2799 = vrot.lane.b32.xlu0 %v2797, 126
        %v2800 = vpop.permute.xlu0 %2799
        %v2802 = vadd.f32 %v2794, %v2800
        %v2803 = vxor.u32 %v2802, 2147483648
        %v2804 = vmul.f32 %v2803, 1.442695
        %v2805 = vpow.pop %v2804
        %v2806 = vadd.f32 %v2805, 1.0
        %v2807 = vrcp.pop %v2806
        %v2808 = vmul.f32 1.0, %v2807
        %v2810 = vlaneseq
        %v2811 = vshrl.u32 %v2810, 7
        %v2812 = vsub.s32 0, %v2811
        %v2813 = vrot.slane %v2808, %v2812
        %v2815 = vmul.f32 %v2672, %v2813
        %v2816 = vmul.f32 %v2673, %v2813
        %v2817 = vmul.f32 %v2674, %v2813
        %v2818 = vmul.f32 %v2675, %v2813
        %v2819 = vmul.f32 %v2676, %v2813
        %v2820 = vmul.f32 %v2677, %v2813
        %v2821 = vmul.f32 %v2678, %v2813
        %v2822 = vmul.f32 %v2679, %v2813
        %v2823 = vmul.f32 %v2680, %v2813
        %v2824 = vmul.f32 %v2681, %v2813
        %v2825 = vmul.f32 %v2682, %v2813
        %v2826 = vmul.f32 %v2683, %v2813
        %v2827 = vmul.f32 %v2684, %v2813
        %v2828 = vmul.f32 %v2685, %v2813
        %v2829 = vmul.f32 %v2686, %v2813
        %v2830 = vmul.f32 %v2687, %v2813
        %v2831 = vmul.f32 %v2688, %v2813
        %v2832 = vmul.f32 %v2689, %v2813
        %v2833 = vmul.f32 %v2690, %v2813
        %v2834 = vmul.f32 %v2691, %v2813
        %v2835 = vmul.f32 %v2692, %v2813
        %v2836 = vmul.f32 %v2693, %v2813
        %v2837 = vmul.f32 %v2694, %v2813
        %v2838 = vmul.f32 %v2695, %v2813
        %v2839 = vmul.f32 %v2696, %v2813
        %v2840 = vmul.f32 %v2697, %v2813
        %v2841 = vmul.f32 %v2698, %v2813
        %v2842 = vmul.f32 %v2699, %v2813
        %v2843 = vmul.f32 %v2700, %v2813
        %v2844 = vmul.f32 %v2701, %v2813
        %v2845 = vmul.f32 %v2702, %v2813
        %v2846 = vmul.f32 %v2703, %v2813
        %2847 = vst.msk [vmem:[%s352] sm:$0xff] %vm1253, %v2815
        %2848 = vst.msk [vmem:[%s352 + $0x8] sm:$0xff] %vm1253, %v2816
        %2849 = vst.msk [vmem:[%s352 + $0x10] sm:$0xff] %vm1253, %v2817
        %2850 = vst.msk [vmem:[%s352 + $0x18] sm:$0xff] %vm1253, %v2818
        %2851 = vst.msk [vmem:[%s352 + $0x20] sm:$0xff] %vm1253, %v2819
        %2852 = vst.msk [vmem:[%s352 + $0x28] sm:$0xff] %vm1253, %v2820
        %2853 = vst.msk [vmem:[%s352 + $0x30] sm:$0xff] %vm1253, %v2821
        %2854 = vst.msk [vmem:[%s352 + $0x38] sm:$0xff] %vm1253, %v2822
        %2855 = vst.msk [vmem:[%s352 + $0x40] sm:$0xff] %vm1253, %v2823
        %2856 = vst.msk [vmem:[%s352 + $0x48] sm:$0xff] %vm1253, %v2824
        %2857 = vst.msk [vmem:[%s352 + $0x50] sm:$0xff] %vm1253, %v2825
        %2858 = vst.msk [vmem:[%s352 + $0x58] sm:$0xff] %vm1253, %v2826
        %2859 = vst.msk [vmem:[%s352 + $0x60] sm:$0xff] %vm1253, %v2827
        %2860 = vst.msk [vmem:[%s352 + $0x68] sm:$0xff] %vm1253, %v2828
        %2861 = vst.msk [vmem:[%s352 + $0x70] sm:$0xff] %vm1253, %v2829
        %2862 = vst.msk [vmem:[%s352 + $0x78] sm:$0xff] %vm1253, %v2830
        %2863 = vst.msk [vmem:[%s352 + $0x80] sm:$0xff] %vm1253, %v2831
        %2864 = vst.msk [vmem:[%s352 + $0x88] sm:$0xff] %vm1253, %v2832
        %2865 = vst.msk [vmem:[%s352 + $0x90] sm:$0xff] %vm1253, %v2833
        %2866 = vst.msk [vmem:[%s352 + $0x98] sm:$0xff] %vm1253, %v2834
        %2867 = vst.msk [vmem:[%s352 + $0xa0] sm:$0xff] %vm1253, %v2835
        %2868 = vst.msk [vmem:[%s352 + $0xa8] sm:$0xff] %vm1253, %v2836
        %2869 = vst.msk [vmem:[%s352 + $0xb0] sm:$0xff] %vm1253, %v2837
        %2870 = vst.msk [vmem:[%s352 + $0xb8] sm:$0xff] %vm1253, %v2838
        %2871 = vst.msk [vmem:[%s352 + $0xc0] sm:$0xff] %vm1253, %v2839
        %2872 = vst.msk [vmem:[%s352 + $0xc8] sm:$0xff] %vm1253, %v2840
        %2873 = vst.msk [vmem:[%s352 + $0xd0] sm:$0xff] %vm1253, %v2841
        %2874 = vst.msk [vmem:[%s352 + $0xd8] sm:$0xff] %vm1253, %v2842
        %2875 = vst.msk [vmem:[%s352 + $0xe0] sm:$0xff] %vm1253, %v2843
        %2876 = vst.msk [vmem:[%s352 + $0xe8] sm:$0xff] %vm1253, %v2844
        %2877 = vst.msk [vmem:[%s352 + $0xf0] sm:$0xff] %vm1253, %v2845
        %2878 = vst.msk [vmem:[%s352 + $0xf8] sm:$0xff] %vm1253, %v2846
        %p2879 = scmp.lt.s32.totalorder %s25, 1
        %s2880 = scalar_select %p2879, %s25, 1
        %s2881 = smul.addr %s2880, 32
        %s2882 = smul.addr %s2881, 8
        %s2883 = scalar_lea.vmem %s7, %s2882
        // Predicated region
        $region61: #{tpu_custom_call.1} parent=47 // pred_check
          %p2884 = pneg %p200
        $region62: #{tpu_custom_call.1} parent=47 // pred_check_branch
          %2886 = sbr.rel (%p2884) target = $region64
        $region63: #{tpu_custom_call.1} parent=47 // pred_region
          _
        $region64: #{tpu_custom_call.1} parent=47 // pred_fallthru
          _
      $region48: #{tpu_custom_call.1} parent=5 // pred_fallthru
        _
      %p2887 = scmp.le.s32.totalorder 2, %s20
      // Predicated region
      $region65: #{tpu_custom_call.1} parent=5 // pred_check
        %p2888 = pneg %p2887
      $region66: #{tpu_custom_call.1} parent=5 // pred_check_branch
        %2890 = sbr.rel (%p2888) target = $region68
      $region67: #{tpu_custom_call.1} parent=5 // pred_region
        %s2891 = ssub.s32 %s20, 2
        // Predicated region
        $region69: #{tpu_custom_call.1} parent=67 // pred_check
          %p2892 = pneg %p206
        $region70: #{tpu_custom_call.1} parent=67 // pred_check_branch
          %2894 = sbr.rel (%p2892) target = $region72
        $region71: #{tpu_custom_call.1} parent=67 // pred_region
          %p2895 = scmp.lt.s32.totalorder %s26, 1
          %s2896 = scalar_select %p2895, %s26, 1
          %s2897 = smul.addr %s2896, 32
          %s2898 = smul.addr %s2897, 8
          %s2899 = scalar_lea.vmem %s7, %s2898
        $region72: #{tpu_custom_call.1} parent=67 // pred_fallthru
          _
      $region68: #{tpu_custom_call.1} parent=5 // pred_fallthru
        _
    $region6: #{tpu_custom_call.1} parent=1 // loop_footer
      %s24 = sadd.s32 1, %s20
    $region7: #{tpu_custom_call.1} parent=1 // loop_footer_branch
      %19 = sbr.rel target = $region3
    $region8: #{tpu_custom_call.1} parent=1 // loop_exit
      _
    %2900 = vsyncpa [#allocation8], 1
    %s2901 = scalar_lea.sflag [#allocation8], 1
    %2902 = vsyncpa %s2901, 1
    %2903 = vsyncpa [#allocation11], 1
    %s2904 = scalar_lea.sflag [#allocation11], 1
    %2905 = vsyncpa %s2904, 1
    %2906 = vsyncpa [#allocation9], 1
    %s2907 = scalar_lea.sflag [#allocation9], 1
    %2908 = vsyncpa %s2907, 1

</llo_original>
